<compile_context>
chip_gen: v6e
topology: v6e:2x2x1
jax: 0.10.0
libtpu: 0.0.40
codegen_flags: <defaults>
</compile_context>

<pallas_src>
import functools

import jax
import jax.numpy as jnp
from jax import lax
from jax.experimental import pallas as pl
from jax.experimental.pallas import tpu as pltpu


# ---------------------------------------------------------------------------
# Fused kernel: projections + head-batched attention + output projection
# ---------------------------------------------------------------------------
def _fused_cross_attention_kernel(
    x_ref, ctx_ref, wq_ref, wk_ref, wv_ref, wo_ref, bo_ref,   # inputs
    o_ref,                                                    # output
    k_scratch, v_scratch,                                     # VMEM scratch
    *, n_heads, dim_head, compute_dtype, cache_kv):
    qi = pl.program_id(1)

    def project_kv():
        ctx = ctx_ref[0].astype(compute_dtype)                              # (M, Dc)
        k = jnp.dot(ctx, wk_ref[...], preferred_element_type=jnp.float32)   # (M, inner)
        v = jnp.dot(ctx, wv_ref[...], preferred_element_type=jnp.float32)   # (M, inner)
        # Head-major scratch (n_heads, M, d): the narrow lane slices are paid
        # once per batch element here, never in the per-q-tile hot path.
        for h in range(n_heads):
            lo = h * dim_head
            k_scratch[h] = k[:, lo:lo + dim_head].astype(compute_dtype)
            v_scratch[h] = v[:, lo:lo + dim_head].astype(compute_dtype)

    if cache_kv:
        @pl.when(qi == 0)
        def _():
            project_kv()
    else:
        project_kv()

    # ---- Q projection (softmax scale already folded into wq): one wide MXU
    #      pass, then a single relayout to head-major (h, tq, d) per q tile ----
    x = x_ref[0].astype(compute_dtype)                                       # (tq, Dq)
    q = jnp.dot(x, wq_ref[...], preferred_element_type=jnp.float32)          # (tq, inner)
    q_hm = jnp.stack(
        [q[:, h * dim_head:(h + 1) * dim_head] for h in range(n_heads)],
        axis=0).astype(compute_dtype)                                        # (h, tq, d)

    # ---- head-batched attention ----
    # TODO(synk): optional `mask` argument of the PyTorch forward is not wired
    # up (the reference call path uses mask=None).
    # TODO(synk): for self-attention-sized contexts (M ~ N, large) add a
    # KV-axis tile with online softmax instead of materializing full K/V + sim.
    sim = lax.dot_general(q_hm, k_scratch[...],
                          (((2,), (2,)), ((0,), (0,))),
                          preferred_element_type=jnp.float32)                # (h, tq, M)
    m = jnp.max(sim, axis=-1, keepdims=True)
    p = jnp.exp(sim - m)                                                     # EUP, f32
    l = jnp.sum(p, axis=-1, keepdims=True)                                   # (h, tq, 1)
    o_hm = lax.dot_general(p.astype(compute_dtype), v_scratch[...],
                           (((2,), (1,)), ((0,), (0,))),
                           preferred_element_type=jnp.float32)               # (h, tq, d)
    # Normalize AFTER the PV matmul: broadcast multiply over dim_head, not M.
    o_hm = o_hm * pl.reciprocal(l, approx=True)

    # ---- fused output projection: heads back at their natural lane offsets,
    #      single inner-deep matmul into the lane-dense (padded) Dq ----
    o_flat = jnp.concatenate([o_hm[h] for h in range(n_heads)],
                             axis=-1).astype(compute_dtype)                  # (tq, inner)
    out = jnp.dot(o_flat, wo_ref[...], preferred_element_type=jnp.float32)   # (tq, Dq_pad)
    # TODO(synk): nn.Dropout in to_out is a no-op in eval mode and is omitted.
    o_ref[0] = (out + bo_ref[...]).astype(o_ref.dtype)


# ---------------------------------------------------------------------------
# Wrapper
# ---------------------------------------------------------------------------
def _round_up(x, m):
    return ((x + m - 1) // m) * m


def _tpu_hints():
    """Returns (physical VMEM bytes, likely multi-TensorCore chip)."""
    try:
        cap = int(pltpu.get_tpu_info().vmem_capacity_bytes)
    except Exception:
        cap = 64 * 1024 * 1024            # conservative default (v7x per-core VMEM)
    return cap, cap <= 64 * 1024 * 1024   # 64 MiB/TC => v7x-like (2 TCs/chip)


def cross_attention(x, context, params, *, n_heads, dim_head,
                    compute_dtype=jnp.bfloat16):
    """Fused Pallas CrossAttention.forward (mask=None, eval-mode dropout)."""
    B, N, Dq = x.shape
    _, M, Dc = context.shape
    inner = n_heads * dim_head
    scale = dim_head ** (-0.5)

    vmem_cap, multicore = _tpu_hints()
    max_tile = 256 if vmem_cap <= 64 * 1024 * 1024 else 512
    vmem_limit = min(int(0.75 * vmem_cap), 100 * 1024 * 1024)

    # ---- q-axis tiling: pad the sequence to a multiple of the (8-aligned)
    #      tile instead of ever falling back to a full-N block ----
    tq = min(max_tile, _round_up(N, 8))
    n_pad = _round_up(N, tq)
    n_q = n_pad // tq
    if n_pad != N:
        x = jnp.pad(x, ((0, 0), (0, n_pad - N), (0, 0)))

    # ---- weights: PyTorch Linear stores (out, in); y = x @ W.T.
    #      Fold softmax scale into Wq (free); pad Wo / bias columns so the
    #      output stores are lane-dense (multiple of 128). ----
    dq_pad = _round_up(Dq, 128)
    wq = (params["wq"].T * scale).astype(compute_dtype)                 # (Dq, inner)
    wk = params["wk"].T.astype(compute_dtype)                           # (Dc, inner)
    wv = params["wv"].T.astype(compute_dtype)                           # (Dc, inner)
    wo = jnp.pad(params["wo"].T, ((0, 0), (0, dq_pad - Dq))).astype(compute_dtype)
    bo = jnp.pad(params["bo"], (0, dq_pad - Dq)).reshape(1, dq_pad).astype(jnp.float32)

    # K/V caching across q tiles requires the q axis to be "arbitrary".  If
    # that would leave a second TensorCore idle (B == 1 on a v7x-like part),
    # recompute K/V per q tile and mark the q axis "parallel" instead.
    cache_kv = (n_q > 1) and not (B == 1 and multicore)
    q_sem = "arbitrary" if cache_kv else "parallel"

    kernel = functools.partial(
        _fused_cross_attention_kernel,
        n_heads=n_heads, dim_head=dim_head,
        compute_dtype=compute_dtype, cache_kv=cache_kv)

    kv_proj_count = 1 if cache_kv else n_q
    wbytes = jnp.dtype(compute_dtype).itemsize
    flops = 2 * B * (n_pad * Dq * inner                       # q projection
                     + 2 * M * Dc * inner * kv_proj_count     # k / v projections
                     + 2 * n_pad * M * inner                  # q k^T and p v
                     + n_pad * inner * dq_pad)                # output projection
    bytes_accessed = int(
        x.size * x.dtype.itemsize
        + context.size * context.dtype.itemsize
        + (wq.size + wk.size + wv.size + wo.size) * wbytes
        + bo.size * 4
        + B * n_pad * dq_pad * x.dtype.itemsize)

    out = pl.pallas_call(
        kernel,
        out_shape=jax.ShapeDtypeStruct((B, n_pad, dq_pad), x.dtype),
        grid_spec=pltpu.PrefetchScalarGridSpec(
            num_scalar_prefetch=0,
            grid=(B, n_q),
            in_specs=[
                pl.BlockSpec((1, tq, Dq), lambda b, qi: (b, qi, 0)),
                pl.BlockSpec((1, M, Dc), lambda b, qi: (b, 0, 0)),
                # NOTE: weight / bias / ctx block indices never change; a
                # pipeline_mode=pl.Buffered(1) hint would halve their VMEM
                # footprint but is left at the default for portability.
                pl.BlockSpec((Dq, inner), lambda b, qi: (0, 0)),
                pl.BlockSpec((Dc, inner), lambda b, qi: (0, 0)),
                pl.BlockSpec((Dc, inner), lambda b, qi: (0, 0)),
                pl.BlockSpec((inner, dq_pad), lambda b, qi: (0, 0)),
                pl.BlockSpec((1, dq_pad), lambda b, qi: (0, 0)),
            ],
            out_specs=pl.BlockSpec((1, tq, dq_pad), lambda b, qi: (b, qi, 0)),
            scratch_shapes=[
                pltpu.VMEM((n_heads, M, dim_head), compute_dtype),   # K (head-major)
                pltpu.VMEM((n_heads, M, dim_head), compute_dtype),   # V (head-major)
            ],
        ),
        compiler_params=pltpu.CompilerParams(
            dimension_semantics=("parallel", q_sem),
            vmem_limit_bytes=vmem_limit,
        ),
        cost_estimate=pl.CostEstimate(
            flops=int(flops),
            transcendentals=int(B * n_heads * n_pad * M),
            bytes_accessed=bytes_accessed,
        ),
    )(x, context, wq, wk, wv, wo, bo)

    return out[:, :N, :Dq]


# ---------------------------------------------------------------------------
# pure-JAX reference (mirrors the PyTorch forward, mask=None, dropout no-op)
# ---------------------------------------------------------------------------
def cross_attention_ref(x, context, params, *, n_heads, dim_head):
    B, N, Dq = x.shape
    q = x @ params["wq"].T
    k = context @ params["wk"].T
    v = context @ params["wv"].T

    def split(t):
        b, n, _ = t.shape
        return t.reshape(b, n, n_heads, dim_head).transpose(0, 2, 1, 3)

    q, k, v = split(q), split(k), split(v)
    sim = jnp.einsum("bhid,bhjd->bhij", q, k) * (dim_head ** (-0.5))
    p = jax.nn.softmax(sim, axis=-1)
    o = jnp.einsum("bhij,bhjd->bhid", p, v)
    o = o.transpose(0, 2, 1, 3).reshape(B, N, n_heads * dim_head)
    return o @ params["wo"].T + params["bo"]


if __name__ == "__main__":
    # small shapes consistent with the module
    B, N, M = 2, 16, 8
    query_dim, context_dim = 32, 24
    n_heads, dim_head = 4, 16
    inner = n_heads * dim_head

    key = jax.random.PRNGKey(0)
    kx, kc, k1, k2, k3, k4, k5 = jax.random.split(key, 7)

    x = jax.random.normal(kx, (B, N, query_dim), jnp.float32)
    context = jax.random.normal(kc, (B, M, context_dim), jnp.float32)

    # deterministic synthetic parameters (PyTorch Linear weight layout: (out, in))
    params = {
        "wq": 0.05 * jax.random.normal(k1, (inner, query_dim), jnp.float32),
        "wk": 0.05 * jax.random.normal(k2, (inner, context_dim), jnp.float32),
        "wv": 0.05 * jax.random.normal(k3, (inner, context_dim), jnp.float32),
        "wo": 0.05 * jax.random.normal(k4, (query_dim, inner), jnp.float32),
        "bo": 0.05 * jax.random.normal(k5, (query_dim,), jnp.float32),
    }

    ref = cross_attention_ref(x, context, params,
                              n_heads=n_heads, dim_head=dim_head)

    # f32 compute path (approx reciprocal -> slightly relaxed tolerance)
    out_f32 = cross_attention(x, context, params, n_heads=n_heads,
                              dim_head=dim_head, compute_dtype=jnp.float32)
    out_f32 = jax.block_until_ready(out_f32)
    assert out_f32.shape == (B, N, query_dim)
    assert jnp.allclose(out_f32, ref, atol=2e-3, rtol=2e-3), (
        float(jnp.max(jnp.abs(out_f32 - ref)))
    )

    # default bf16 MXU-operand path (v6e/v7x perf mode), f32 accumulation
    out_bf16 = cross_attention(x, context, params, n_heads=n_heads,
                               dim_head=dim_head)
    out_bf16 = jax.block_until_ready(out_bf16)
    assert out_bf16.shape == (B, N, query_dim)
    assert jnp.allclose(out_bf16, ref, atol=5e-2, rtol=5e-2), (
        float(jnp.max(jnp.abs(out_bf16 - ref)))
    )

    print("KERNEL_OK")
</pallas_src>

<mosaic_0001>
module attributes {stable_mosaic.version = 11 : i64} {
  func.func @_fused_cross_attention_kernel(%arg0: i32, %arg1: i32, %arg2: memref<1x16x32xf32, #tpu.memory_space<vmem>>, %arg3: memref<1x8x24xf32, #tpu.memory_space<vmem>>, %arg4: memref<32x64xf32, #tpu.memory_space<vmem>>, %arg5: memref<24x64xf32, #tpu.memory_space<vmem>>, %arg6: memref<24x64xf32, #tpu.memory_space<vmem>>, %arg7: memref<64x128xf32, #tpu.memory_space<vmem>>, %arg8: memref<1x128xf32, #tpu.memory_space<vmem>>, %arg9: memref<1x16x128xf32, #tpu.memory_space<vmem>>, %arg10: memref<4x8x16xf32, #tpu.memory_space<vmem>>, %arg11: memref<4x8x16xf32, #tpu.memory_space<vmem>>) attributes {dimension_semantics = [#tpu.dimension_semantics<parallel>, #tpu.dimension_semantics<parallel>], iteration_bounds = array<i64: 2, 1>, scalar_prefetch = 0 : i64, scratch_operands = 2 : i64, tpu.core_type = #tpu.core_type<tc>, window_params = [{transform_indices = @transform_0, window_bounds = array<i64: 1, 16, 32>}, {transform_indices = @transform_1, window_bounds = array<i64: 1, 8, 24>}, {pipeline_mode = #tpu.pipeline_mode<synchronous>, transform_indices = @transform_2, window_bounds = array<i64: 32, 64>}, {pipeline_mode = #tpu.pipeline_mode<synchronous>, transform_indices = @transform_3, window_bounds = array<i64: 24, 64>}, {pipeline_mode = #tpu.pipeline_mode<synchronous>, transform_indices = @transform_4, window_bounds = array<i64: 24, 64>}, {pipeline_mode = #tpu.pipeline_mode<synchronous>, transform_indices = @transform_5, window_bounds = array<i64: 64, 128>}, {pipeline_mode = #tpu.pipeline_mode<synchronous>, transform_indices = @transform_6, window_bounds = array<i64: 1, 128>}, {transform_indices = @transform_7, window_bounds = array<i64: 1, 16, 128>}]} {
    %c0 = arith.constant 0 : index
    %c0_0 = arith.constant 0 : index
    %c0_1 = arith.constant 0 : index
    %0 = vector.load %arg3[%c0, %c0_0, %c0_1] : memref<1x8x24xf32, #tpu.memory_space<vmem>>, vector<1x8x24xf32>
    %1 = vector.shape_cast %0 : vector<1x8x24xf32> to vector<8x24xf32>
    %c0_2 = arith.constant 0 : index
    %c0_3 = arith.constant 0 : index
    %2 = vector.load %arg5[%c0_2, %c0_3] : memref<24x64xf32, #tpu.memory_space<vmem>>, vector<24x64xf32>
    %cst = arith.constant dense<0.000000e+00> : vector<8x64xf32>
    %3 = tpu.matmul %1, %2, %cst {dimension_numbers = #tpu.dot_dimension_numbers<[1], [0], [0], [1], [0, 0, 1, 1], [], []>} : vector<8x24xf32>, vector<24x64xf32>, vector<8x64xf32> -> vector<8x64xf32>
    %c0_4 = arith.constant 0 : index
    %c0_5 = arith.constant 0 : index
    %4 = vector.load %arg6[%c0_4, %c0_5] : memref<24x64xf32, #tpu.memory_space<vmem>>, vector<24x64xf32>
    %cst_6 = arith.constant dense<0.000000e+00> : vector<8x64xf32>
    %5 = tpu.matmul %1, %4, %cst_6 {dimension_numbers = #tpu.dot_dimension_numbers<[1], [0], [0], [1], [0, 0, 1, 1], [], []>} : vector<8x24xf32>, vector<24x64xf32>, vector<8x64xf32> -> vector<8x64xf32>
    %6 = vector.extract_strided_slice %3 {offsets = [0, 0], sizes = [8, 16], strides = [1, 1]} : vector<8x64xf32> to vector<8x16xf32>
    %c0_7 = arith.constant 0 : index
    %c0_8 = arith.constant 0 : index
    %c0_9 = arith.constant 0 : index
    %7 = vector.load %arg10[%c0_7, %c0_8, %c0_9] : memref<4x8x16xf32, #tpu.memory_space<vmem>>, vector<1x8x16xf32>
    %8 = vector.shape_cast %7 : vector<1x8x16xf32> to vector<8x16xf32>
    %9 = vector.shape_cast %6 : vector<8x16xf32> to vector<1x8x16xf32>
    tpu.vector_store %arg10[%c0_7, %c0_8, %c0_9], %9 {strides = array<i32>} : memref<4x8x16xf32, #tpu.memory_space<vmem>>, vector<1x8x16xf32>,
    %10 = vector.extract_strided_slice %5 {offsets = [0, 0], sizes = [8, 16], strides = [1, 1]} : vector<8x64xf32> to vector<8x16xf32>
    %c0_10 = arith.constant 0 : index
    %c0_11 = arith.constant 0 : index
    %c0_12 = arith.constant 0 : index
    %11 = vector.load %arg11[%c0_10, %c0_11, %c0_12] : memref<4x8x16xf32, #tpu.memory_space<vmem>>, vector<1x8x16xf32>
    %12 = vector.shape_cast %11 : vector<1x8x16xf32> to vector<8x16xf32>
    %13 = vector.shape_cast %10 : vector<8x16xf32> to vector<1x8x16xf32>
    tpu.vector_store %arg11[%c0_10, %c0_11, %c0_12], %13 {strides = array<i32>} : memref<4x8x16xf32, #tpu.memory_space<vmem>>, vector<1x8x16xf32>,
    %14 = vector.extract_strided_slice %3 {offsets = [0, 16], sizes = [8, 16], strides = [1, 1]} : vector<8x64xf32> to vector<8x16xf32>
    %c1 = arith.constant 1 : index
    %c0_13 = arith.constant 0 : index
    %c0_14 = arith.constant 0 : index
    %15 = vector.load %arg10[%c1, %c0_13, %c0_14] : memref<4x8x16xf32, #tpu.memory_space<vmem>>, vector<1x8x16xf32>
    %16 = vector.shape_cast %15 : vector<1x8x16xf32> to vector<8x16xf32>
    %17 = vector.shape_cast %14 : vector<8x16xf32> to vector<1x8x16xf32>
    tpu.vector_store %arg10[%c1, %c0_13, %c0_14], %17 {strides = array<i32>} : memref<4x8x16xf32, #tpu.memory_space<vmem>>, vector<1x8x16xf32>,
    %18 = vector.extract_strided_slice %5 {offsets = [0, 16], sizes = [8, 16], strides = [1, 1]} : vector<8x64xf32> to vector<8x16xf32>
    %c1_15 = arith.constant 1 : index
    %c0_16 = arith.constant 0 : index
    %c0_17 = arith.constant 0 : index
    %19 = vector.load %arg11[%c1_15, %c0_16, %c0_17] : memref<4x8x16xf32, #tpu.memory_space<vmem>>, vector<1x8x16xf32>
    %20 = vector.shape_cast %19 : vector<1x8x16xf32> to vector<8x16xf32>
    %21 = vector.shape_cast %18 : vector<8x16xf32> to vector<1x8x16xf32>
    tpu.vector_store %arg11[%c1_15, %c0_16, %c0_17], %21 {strides = array<i32>} : memref<4x8x16xf32, #tpu.memory_space<vmem>>, vector<1x8x16xf32>,
    %22 = vector.extract_strided_slice %3 {offsets = [0, 32], sizes = [8, 16], strides = [1, 1]} : vector<8x64xf32> to vector<8x16xf32>
    %c2 = arith.constant 2 : index
    %c0_18 = arith.constant 0 : index
    %c0_19 = arith.constant 0 : index
    %23 = vector.load %arg10[%c2, %c0_18, %c0_19] : memref<4x8x16xf32, #tpu.memory_space<vmem>>, vector<1x8x16xf32>
    %24 = vector.shape_cast %23 : vector<1x8x16xf32> to vector<8x16xf32>
    %25 = vector.shape_cast %22 : vector<8x16xf32> to vector<1x8x16xf32>
    tpu.vector_store %arg10[%c2, %c0_18, %c0_19], %25 {strides = array<i32>} : memref<4x8x16xf32, #tpu.memory_space<vmem>>, vector<1x8x16xf32>,
    %26 = vector.extract_strided_slice %5 {offsets = [0, 32], sizes = [8, 16], strides = [1, 1]} : vector<8x64xf32> to vector<8x16xf32>
    %c2_20 = arith.constant 2 : index
    %c0_21 = arith.constant 0 : index
    %c0_22 = arith.constant 0 : index
    %27 = vector.load %arg11[%c2_20, %c0_21, %c0_22] : memref<4x8x16xf32, #tpu.memory_space<vmem>>, vector<1x8x16xf32>
    %28 = vector.shape_cast %27 : vector<1x8x16xf32> to vector<8x16xf32>
    %29 = vector.shape_cast %26 : vector<8x16xf32> to vector<1x8x16xf32>
    tpu.vector_store %arg11[%c2_20, %c0_21, %c0_22], %29 {strides = array<i32>} : memref<4x8x16xf32, #tpu.memory_space<vmem>>, vector<1x8x16xf32>,
    %30 = vector.extract_strided_slice %3 {offsets = [0, 48], sizes = [8, 16], strides = [1, 1]} : vector<8x64xf32> to vector<8x16xf32>
    %c3 = arith.constant 3 : index
    %c0_23 = arith.constant 0 : index
    %c0_24 = arith.constant 0 : index
    %31 = vector.load %arg10[%c3, %c0_23, %c0_24] : memref<4x8x16xf32, #tpu.memory_space<vmem>>, vector<1x8x16xf32>
    %32 = vector.shape_cast %31 : vector<1x8x16xf32> to vector<8x16xf32>
    %33 = vector.shape_cast %30 : vector<8x16xf32> to vector<1x8x16xf32>
    tpu.vector_store %arg10[%c3, %c0_23, %c0_24], %33 {strides = array<i32>} : memref<4x8x16xf32, #tpu.memory_space<vmem>>, vector<1x8x16xf32>,
    %34 = vector.extract_strided_slice %5 {offsets = [0, 48], sizes = [8, 16], strides = [1, 1]} : vector<8x64xf32> to vector<8x16xf32>
    %c3_25 = arith.constant 3 : index
    %c0_26 = arith.constant 0 : index
    %c0_27 = arith.constant 0 : index
    %35 = vector.load %arg11[%c3_25, %c0_26, %c0_27] : memref<4x8x16xf32, #tpu.memory_space<vmem>>, vector<1x8x16xf32>
    %36 = vector.shape_cast %35 : vector<1x8x16xf32> to vector<8x16xf32>
    %37 = vector.shape_cast %34 : vector<8x16xf32> to vector<1x8x16xf32>
    tpu.vector_store %arg11[%c3_25, %c0_26, %c0_27], %37 {strides = array<i32>} : memref<4x8x16xf32, #tpu.memory_space<vmem>>, vector<1x8x16xf32>,
    %c0_28 = arith.constant 0 : index
    %c0_29 = arith.constant 0 : index
    %c0_30 = arith.constant 0 : index
    %38 = vector.load %arg2[%c0_28, %c0_29, %c0_30] : memref<1x16x32xf32, #tpu.memory_space<vmem>>, vector<1x16x32xf32>
    %39 = vector.shape_cast %38 : vector<1x16x32xf32> to vector<16x32xf32>
    %c0_31 = arith.constant 0 : index
    %c0_32 = arith.constant 0 : index
    %40 = vector.load %arg4[%c0_31, %c0_32] : memref<32x64xf32, #tpu.memory_space<vmem>>, vector<32x64xf32>
    %cst_33 = arith.constant dense<0.000000e+00> : vector<16x64xf32>
    %41 = tpu.matmul %39, %40, %cst_33 {dimension_numbers = #tpu.dot_dimension_numbers<[1], [0], [0], [1], [0, 0, 1, 1], [], []>} : vector<16x32xf32>, vector<32x64xf32>, vector<16x64xf32> -> vector<16x64xf32>
    %42 = vector.extract_strided_slice %41 {offsets = [0, 0], sizes = [16, 16], strides = [1, 1]} : vector<16x64xf32> to vector<16x16xf32>
    %43 = vector.extract_strided_slice %41 {offsets = [0, 16], sizes = [16, 16], strides = [1, 1]} : vector<16x64xf32> to vector<16x16xf32>
    %44 = vector.extract_strided_slice %41 {offsets = [0, 32], sizes = [16, 16], strides = [1, 1]} : vector<16x64xf32> to vector<16x16xf32>
    %45 = vector.extract_strided_slice %41 {offsets = [0, 48], sizes = [16, 16], strides = [1, 1]} : vector<16x64xf32> to vector<16x16xf32>
    %46 = vector.shape_cast %42 : vector<16x16xf32> to vector<1x16x16xf32>
    %47 = vector.shape_cast %43 : vector<16x16xf32> to vector<1x16x16xf32>
    %48 = vector.shape_cast %44 : vector<16x16xf32> to vector<1x16x16xf32>
    %49 = vector.shape_cast %45 : vector<16x16xf32> to vector<1x16x16xf32>
    %50 = tpu.concatenate %46, %47, %48, %49 in 0 : vector<1x16x16xf32>, vector<1x16x16xf32>, vector<1x16x16xf32>, vector<1x16x16xf32> -> vector<4x16x16xf32>
    %c0_34 = arith.constant 0 : index
    %c0_35 = arith.constant 0 : index
    %c0_36 = arith.constant 0 : index
    %51 = vector.load %arg10[%c0_34, %c0_35, %c0_36] : memref<4x8x16xf32, #tpu.memory_space<vmem>>, vector<4x8x16xf32>
    %cst_37 = arith.constant dense<0.000000e+00> : vector<4x16x8xf32>
    %52 = tpu.matmul %50, %51, %cst_37 {dimension_numbers = #tpu.dot_dimension_numbers<[2], [2], [1], [1], [0, 0, 0, 1, 1, 1], [0], [0]>} : vector<4x16x16xf32>, vector<4x8x16xf32>, vector<4x16x8xf32> -> vector<4x16x8xf32>
    %cst_38 = arith.constant dense<0xFF800000> : vector<4x16xf32>
    %53 = vector.multi_reduction <maximumf>, %52, %cst_38 [2] : vector<4x16x8xf32> to vector<4x16xf32>
    %54 = vector.shape_cast %53 : vector<4x16xf32> to vector<4x16x1xf32>
    %55 = vector.broadcast %54 : vector<4x16x1xf32> to vector<4x16x8xf32>
    %56 = arith.subf %52, %55 : vector<4x16x8xf32>
    %57 = math.exp %56 : vector<4x16x8xf32>
    %cst_39 = arith.constant dense<0.000000e+00> : vector<4x16xf32>
    %58 = vector.multi_reduction <add>, %57, %cst_39 [2] : vector<4x16x8xf32> to vector<4x16xf32>
    %59 = vector.shape_cast %58 : vector<4x16xf32> to vector<4x16x1xf32>
    %c0_40 = arith.constant 0 : index
    %c0_41 = arith.constant 0 : index
    %c0_42 = arith.constant 0 : index
    %60 = vector.load %arg11[%c0_40, %c0_41, %c0_42] : memref<4x8x16xf32, #tpu.memory_space<vmem>>, vector<4x8x16xf32>
    %cst_43 = arith.constant dense<0.000000e+00> : vector<4x16x16xf32>
    %61 = tpu.matmul %57, %60, %cst_43 {dimension_numbers = #tpu.dot_dimension_numbers<[2], [1], [1], [2], [0, 0, 0, 1, 1, 2], [0], [0]>} : vector<4x16x8xf32>, vector<4x8x16xf32>, vector<4x16x16xf32> -> vector<4x16x16xf32>
    %62 = tpu.reciprocal %59 {approx = true} : vector<4x16x1xf32> -> vector<4x16x1xf32>
    %63 = vector.broadcast %62 : vector<4x16x1xf32> to vector<4x16x16xf32>
    %64 = arith.mulf %61, %63 : vector<4x16x16xf32>
    %65 = vector.extract_strided_slice %64 {offsets = [0, 0, 0], sizes = [1, 16, 16], strides = [1, 1, 1]} : vector<4x16x16xf32> to vector<1x16x16xf32>
    %66 = vector.shape_cast %65 : vector<1x16x16xf32> to vector<16x16xf32>
    %67 = vector.extract_strided_slice %64 {offsets = [1, 0, 0], sizes = [1, 16, 16], strides = [1, 1, 1]} : vector<4x16x16xf32> to vector<1x16x16xf32>
    %68 = vector.shape_cast %67 : vector<1x16x16xf32> to vector<16x16xf32>
    %69 = vector.extract_strided_slice %64 {offsets = [2, 0, 0], sizes = [1, 16, 16], strides = [1, 1, 1]} : vector<4x16x16xf32> to vector<1x16x16xf32>
    %70 = vector.shape_cast %69 : vector<1x16x16xf32> to vector<16x16xf32>
    %71 = vector.extract_strided_slice %64 {offsets = [3, 0, 0], sizes = [1, 16, 16], strides = [1, 1, 1]} : vector<4x16x16xf32> to vector<1x16x16xf32>
    %72 = vector.shape_cast %71 : vector<1x16x16xf32> to vector<16x16xf32>
    %73 = tpu.concatenate %66, %68, %70, %72 in 1 : vector<16x16xf32>, vector<16x16xf32>, vector<16x16xf32>, vector<16x16xf32> -> vector<16x64xf32>
    %c0_44 = arith.constant 0 : index
    %c0_45 = arith.constant 0 : index
    %74 = vector.load %arg7[%c0_44, %c0_45] : memref<64x128xf32, #tpu.memory_space<vmem>>, vector<64x128xf32>
    %cst_46 = arith.constant dense<0.000000e+00> : vector<16x128xf32>
    %75 = tpu.matmul %73, %74, %cst_46 {dimension_numbers = #tpu.dot_dimension_numbers<[1], [0], [0], [1], [0, 0, 1, 1], [], []>} : vector<16x64xf32>, vector<64x128xf32>, vector<16x128xf32> -> vector<16x128xf32>
    %c0_47 = arith.constant 0 : index
    %c0_48 = arith.constant 0 : index
    %76 = vector.load %arg8[%c0_47, %c0_48] : memref<1x128xf32, #tpu.memory_space<vmem>>, vector<1x128xf32>
    %77 = vector.broadcast %76 : vector<1x128xf32> to vector<16x128xf32>
    %78 = arith.addf %75, %77 : vector<16x128xf32>
    %c0_49 = arith.constant 0 : index
    %c0_50 = arith.constant 0 : index
    %c0_51 = arith.constant 0 : index
    %79 = vector.load %arg9[%c0_49, %c0_50, %c0_51] : memref<1x16x128xf32, #tpu.memory_space<vmem>>, vector<1x16x128xf32>
    %80 = vector.shape_cast %79 : vector<1x16x128xf32> to vector<16x128xf32>
    %81 = vector.shape_cast %78 : vector<16x128xf32> to vector<1x16x128xf32>
    tpu.vector_store %arg9[%c0_49, %c0_50, %c0_51], %81 {strides = array<i32>} : memref<1x16x128xf32, #tpu.memory_space<vmem>>, vector<1x16x128xf32>,
    return
  }
  func.func @transform_0(%arg0: i32, %arg1: i32) -> (i32, i32, i32) {
    %c0_i32 = arith.constant 0 : i32
    %c0_i32_0 = arith.constant 0 : i32
    return %arg0, %arg1, %c0_i32 : i32, i32, i32
  }
  func.func @transform_1(%arg0: i32, %arg1: i32) -> (i32, i32, i32) {
    %c0_i32 = arith.constant 0 : i32
    %c0_i32_0 = arith.constant 0 : i32
    %c0_i32_1 = arith.constant 0 : i32
    return %arg0, %c0_i32, %c0_i32_0 : i32, i32, i32
  }
  func.func @transform_2(%arg0: i32, %arg1: i32) -> (i32, i32) {
    %c0_i32 = arith.constant 0 : i32
    %c0_i32_0 = arith.constant 0 : i32
    %c0_i32_1 = arith.constant 0 : i32
    return %c0_i32, %c0_i32_0 : i32, i32
  }
  func.func @transform_3(%arg0: i32, %arg1: i32) -> (i32, i32) {
    %c0_i32 = arith.constant 0 : i32
    %c0_i32_0 = arith.constant 0 : i32
    %c0_i32_1 = arith.constant 0 : i32
    return %c0_i32, %c0_i32_0 : i32, i32
  }
  func.func @transform_4(%arg0: i32, %arg1: i32) -> (i32, i32) {
    %c0_i32 = arith.constant 0 : i32
    %c0_i32_0 = arith.constant 0 : i32
    %c0_i32_1 = arith.constant 0 : i32
    return %c0_i32, %c0_i32_0 : i32, i32
  }
  func.func @transform_5(%arg0: i32, %arg1: i32) -> (i32, i32) {
    %c0_i32 = arith.constant 0 : i32
    %c0_i32_0 = arith.constant 0 : i32
    %c0_i32_1 = arith.constant 0 : i32
    return %c0_i32, %c0_i32_0 : i32, i32
  }
  func.func @transform_6(%arg0: i32, %arg1: i32) -> (i32, i32) {
    %c0_i32 = arith.constant 0 : i32
    %c0_i32_0 = arith.constant 0 : i32
    %c0_i32_1 = arith.constant 0 : i32
    return %c0_i32, %c0_i32_0 : i32, i32
  }
  func.func @transform_7(%arg0: i32, %arg1: i32) -> (i32, i32, i32) {
    %c0_i32 = arith.constant 0 : i32
    %c0_i32_0 = arith.constant 0 : i32
    return %arg0, %arg1, %c0_i32 : i32, i32, i32
  }
}

</mosaic_0001>

<llo_original>
// kernel: tpu_custom_call.1
$region0: #{tpu_custom_call.1}
  #allocation0 [shape = 'u32[]', space=smem, size = 0x4, offset = 0x4, fixed_abs, tag = 'smem constant byte address 0x4 - core index']
  #allocation1 [shape = 'u32[144,128]{1,0:T(1,128)}', space=vmem, size = 0x12000, scoped, tag = 'internal scratch']
  #allocation2 [shape = 'f32[4,8,16]{2,1,0:T(8,128)}', space=vmem, size = 0x4000, scoped, tag = 'scratch operand']
  #allocation3 [shape = 'f32[4,8,16]{2,1,0:T(8,128)}', space=vmem, size = 0x4000, scoped, tag = 'scratch operand']
  %s0 = inlined_call_operand.hbm [shape: f32[2,16,32], index: 0, kind: input, shape index: {}]
  %s1 = inlined_call_operand.hbm [shape: f32[2,8,24], index: 1, kind: input, shape index: {}]
  %s2 = inlined_call_operand.hbm [shape: f32[32,64], index: 2, kind: input, shape index: {}]
  %s3 = inlined_call_operand.hbm [shape: f32[24,64], index: 3, kind: input, shape index: {}]
  %s4 = inlined_call_operand.hbm [shape: f32[24,64], index: 4, kind: input, shape index: {}]
  %s5 = inlined_call_operand.hbm [shape: f32[64,128], index: 5, kind: input, shape index: {}]
  %s6 = inlined_call_operand.vmem [shape: f32[1,128], index: 6, kind: input, shape index: {}]
  %s7 = inlined_call_operand.hbm [shape: f32[2,16,128], index: 7, kind: output, shape index: {}]
  %s8 = sld [smem:[#allocation0]]
  $region85: #{tpu_custom_call.1} parent=0
    _
  %s10 = ssub.s32 1, %s8
  %s11 = scalar_select 0, %s10, %s8
  $region1: #{tpu_custom_call.1} parent=0
    #allocation4 [shape = 'u8[16384]{0}', space=vmem, size = 0x4000, scoped, tag = 'input window, operand 0']
    #allocation5 [shape = 's32[2]{0}', space=sflag, size = 0x8, scoped, tag = 'scoped memory for tpu_custom_call.1']
    #allocation6 [shape = 's32[2]{0}', space=sflag, size = 0x8, scoped, tag = 'scoped memory for tpu_custom_call.1']
    #allocation7 [shape = 'u8[8192]{0}', space=vmem, size = 0x2000, scoped, tag = 'input window, operand 1']
    #allocation8 [shape = 's32[2]{0}', space=sflag, size = 0x8, scoped, tag = 'scoped memory for tpu_custom_call.1']
    #allocation9 [shape = 'u8[16384]{0}', space=vmem, size = 0x4000, scoped, tag = 'input window, operand 2, single buffered']
    #allocation10 [shape = 'u8[12288]{0}', space=vmem, size = 0x3000, scoped, tag = 'input window, operand 3, single buffered']
    #allocation11 [shape = 's32[1]{0}', space=sflag, size = 0x4, scoped, tag = 'scoped memory for tpu_custom_call.1']
    #allocation12 [shape = 'u8[12288]{0}', space=vmem, size = 0x3000, scoped, tag = 'input window, operand 4, single buffered']
    #allocation13 [shape = 'u8[32768]{0}', space=vmem, size = 0x8000, scoped, tag = 'input window, operand 5, single buffered']
    #allocation14 [shape = 's32[1]{0}', space=sflag, size = 0x4, scoped, tag = 'scoped memory for tpu_custom_call.1']
    #allocation15 [shape = 'u8[16384]{0}', space=vmem, size = 0x4000, scoped, tag = 'output window, operand 0']
    %12 = vsyncpa [#allocation5], 0
    %s13 = scalar_lea.sflag [#allocation5], 1
    %14 = vsyncpa %s13, 0
    %15 = vsyncpa [#allocation8], 0
    %s16 = scalar_lea.sflag [#allocation8], 1
    %17 = vsyncpa %s16, 0
    %18 = vsyncpa [#allocation11], 0
    %19 = vsyncpa [#allocation14], 0
    %20 = vsyncpa [#allocation6], 0
    %s21 = scalar_lea.sflag [#allocation6], 1
    %22 = vsyncpa %s21, 0
    loop: start=0, step=1, limit=4
    $region2: #{tpu_custom_call.1} parent=1 // loop_pre_header
      _
    $region3: #{tpu_custom_call.1} parent=1 // loop_header
      %s24 = sphi 0, %s28
      %p25 = scmp.ge.s32.totalorder %s24, 4
      %s31 = sphi 0, %s43
      %s32 = sphi 0, %s39
      %s33 = sphi 0, %s31
      %s34 = sphi 0, %s32
      %s35 = sphi 0, %s33
      %s36 = sphi 0, %s34
      %s48 = sphi 0, %s50
      %s51 = sphi 0, %s48
      %s52 = sphi 0, %s51
      %s68 = sphi 0, %s52
      %s74 = sphi 0, %s76
      %s77 = sphi 0, %s74
      %s78 = sphi 0, %s77
      %s94 = sphi 0, %s78
      %s98 = sphi 0, %s98
      %s100 = sphi 0, %s98
      %s101 = sphi 0, %s100
      %s115 = sphi 0, %s101
      %s119 = sphi 0, %s119
      %s121 = sphi 0, %s119
      %s122 = sphi 0, %s121
      %s136 = sphi 0, %s122
      %s140 = sphi 0, %s140
      %s142 = sphi 0, %s140
      %s143 = sphi 0, %s142
      %s157 = sphi 0, %s143
      %s161 = sphi 0, %s161
      %s163 = sphi 0, %s161
      %s164 = sphi 0, %s163
      %s178 = sphi 0, %s164
      %s182 = sphi 0, %s182
      %s184 = sphi 0, %s182
      %s185 = sphi 0, %s184
      %s199 = sphi 0, %s185
      %s207 = sphi 0, %s209
      %s210 = sphi 0, %s207
      %s211 = sphi 0, %s210
      %s227 = sphi 0, %s211
    $region4: #{tpu_custom_call.1} parent=1 // loop_header_branch
      %27 = sbr.rel (%p25) target = $region8
    $region5: #{tpu_custom_call.1} parent=1 // loop_body
      %s29 = ssub.s32 %s24, 1
      %s30 = ssub.s32 %s24, 2
      %s37 = sadd.s32 1, %s32
      %p38 = scmp.ge.s32.totalorder %s37, 1
      %s39 = scalar_select %p38, 0, %s37
      %s40 = sadd.s32 1, %s31
      %s41 = scalar_select %p38, %s40, %s31
      %p42 = scmp.ge.s32.totalorder %s41, 2
      %s43 = scalar_select %p42, 0, %s41
      %s44 = ssub.s32 %s31, %s43
      %s45 = ssub.s32 %s32, %s39
      %s46 = sor.u32 %s44, %s45
      %p47 = scmp.eq.s32.totalorder %s46, 0
      %s49 = sadd.s32 %s48, 1
      %s50 = scalar_select %p47, %s48, %s49
      %p53 = pneg %p47
      %p54 = scmp.eq.s32.totalorder %s24, 1
      %p55 = por %p53, %p54
      %p56 = scmp.ne.s32.totalorder %s48, %s51
      %p57 = scmp.eq.s32.totalorder %s24, 0
      %p58 = por %p56, %p57
      %p59 = scmp.ne.s32.totalorder %s48, %s51
      %p60 = scmp.eq.s32.totalorder %s29, 1
      %p61 = por %p59, %p60
      %p62 = scmp.ne.s32.totalorder %s51, %s52
      %p63 = scmp.eq.s32.totalorder %s29, 0
      %p64 = por %p62, %p63
      %p65 = scmp.ne.s32.totalorder %s51, %s52
      %p66 = scmp.eq.s32.totalorder %s30, 1
      %p67 = por %p65, %p66
      %p69 = scmp.ne.s32.totalorder %s52, %s68
      %p70 = scmp.eq.s32.totalorder %s30, 0
      %p71 = por %p69, %p70
      %s72 = ssub.s32 %s31, %s43
      %p73 = scmp.eq.s32.totalorder %s72, 0
      %s75 = sadd.s32 %s74, 1
      %s76 = scalar_select %p73, %s74, %s75
      %p79 = pneg %p73
      %p80 = scmp.eq.s32.totalorder %s24, 1
      %p81 = por %p79, %p80
      %p82 = scmp.ne.s32.totalorder %s74, %s77
      %p83 = scmp.eq.s32.totalorder %s24, 0
      %p84 = por %p82, %p83
      %p85 = scmp.ne.s32.totalorder %s74, %s77
      %p86 = scmp.eq.s32.totalorder %s29, 1
      %p87 = por %p85, %p86
      %p88 = scmp.ne.s32.totalorder %s77, %s78
      %p89 = scmp.eq.s32.totalorder %s29, 0
      %p90 = por %p88, %p89
      %p91 = scmp.ne.s32.totalorder %s77, %s78
      %p92 = scmp.eq.s32.totalorder %s30, 1
      %p93 = por %p91, %p92
      %p95 = scmp.ne.s32.totalorder %s78, %s94
      %p96 = scmp.eq.s32.totalorder %s30, 0
      %p97 = por %p95, %p96
      %s99 = sadd.s32 %s98, 1
      %p102 = scmp.eq.s32.totalorder %s24, 1
      %p103 = scmp.ne.s32.totalorder %s98, %s100
      %p104 = scmp.eq.s32.totalorder %s24, 0
      %p105 = por %p103, %p104
      %p106 = scmp.ne.s32.totalorder %s98, %s100
      %p107 = scmp.eq.s32.totalorder %s29, 1
      %p108 = por %p106, %p107
      %p109 = scmp.ne.s32.totalorder %s100, %s101
      %p110 = scmp.eq.s32.totalorder %s29, 0
      %p111 = por %p109, %p110
      %p112 = scmp.ne.s32.totalorder %s100, %s101
      %p113 = scmp.eq.s32.totalorder %s30, 1
      %p114 = por %p112, %p113
      %p116 = scmp.ne.s32.totalorder %s101, %s115
      %p117 = scmp.eq.s32.totalorder %s30, 0
      %p118 = por %p116, %p117
      %s120 = sadd.s32 %s119, 1
      %p123 = scmp.eq.s32.totalorder %s24, 1
      %p124 = scmp.ne.s32.totalorder %s119, %s121
      %p125 = scmp.eq.s32.totalorder %s24, 0
      %p126 = por %p124, %p125
      %p127 = scmp.ne.s32.totalorder %s119, %s121
      %p128 = scmp.eq.s32.totalorder %s29, 1
      %p129 = por %p127, %p128
      %p130 = scmp.ne.s32.totalorder %s121, %s122
      %p131 = scmp.eq.s32.totalorder %s29, 0
      %p132 = por %p130, %p131
      %p133 = scmp.ne.s32.totalorder %s121, %s122
      %p134 = scmp.eq.s32.totalorder %s30, 1
      %p135 = por %p133, %p134
      %p137 = scmp.ne.s32.totalorder %s122, %s136
      %p138 = scmp.eq.s32.totalorder %s30, 0
      %p139 = por %p137, %p138
      %s141 = sadd.s32 %s140, 1
      %p144 = scmp.eq.s32.totalorder %s24, 1
      %p145 = scmp.ne.s32.totalorder %s140, %s142
      %p146 = scmp.eq.s32.totalorder %s24, 0
      %p147 = por %p145, %p146
      %p148 = scmp.ne.s32.totalorder %s140, %s142
      %p149 = scmp.eq.s32.totalorder %s29, 1
      %p150 = por %p148, %p149
      %p151 = scmp.ne.s32.totalorder %s142, %s143
      %p152 = scmp.eq.s32.totalorder %s29, 0
      %p153 = por %p151, %p152
      %p154 = scmp.ne.s32.totalorder %s142, %s143
      %p155 = scmp.eq.s32.totalorder %s30, 1
      %p156 = por %p154, %p155
      %p158 = scmp.ne.s32.totalorder %s143, %s157
      %p159 = scmp.eq.s32.totalorder %s30, 0
      %p160 = por %p158, %p159
      %s162 = sadd.s32 %s161, 1
      %p165 = scmp.eq.s32.totalorder %s24, 1
      %p166 = scmp.ne.s32.totalorder %s161, %s163
      %p167 = scmp.eq.s32.totalorder %s24, 0
      %p168 = por %p166, %p167
      %p169 = scmp.ne.s32.totalorder %s161, %s163
      %p170 = scmp.eq.s32.totalorder %s29, 1
      %p171 = por %p169, %p170
      %p172 = scmp.ne.s32.totalorder %s163, %s164
      %p173 = scmp.eq.s32.totalorder %s29, 0
      %p174 = por %p172, %p173
      %p175 = scmp.ne.s32.totalorder %s163, %s164
      %p176 = scmp.eq.s32.totalorder %s30, 1
      %p177 = por %p175, %p176
      %p179 = scmp.ne.s32.totalorder %s164, %s178
      %p180 = scmp.eq.s32.totalorder %s30, 0
      %p181 = por %p179, %p180
      %s183 = sadd.s32 %s182, 1
      %p186 = scmp.eq.s32.totalorder %s24, 1
      %p187 = scmp.ne.s32.totalorder %s182, %s184
      %p188 = scmp.eq.s32.totalorder %s24, 0
      %p189 = por %p187, %p188
      %p190 = scmp.ne.s32.totalorder %s182, %s184
      %p191 = scmp.eq.s32.totalorder %s29, 1
      %p192 = por %p190, %p191
      %p193 = scmp.ne.s32.totalorder %s184, %s185
      %p194 = scmp.eq.s32.totalorder %s29, 0
      %p195 = por %p193, %p194
      %p196 = scmp.ne.s32.totalorder %s184, %s185
      %p197 = scmp.eq.s32.totalorder %s30, 1
      %p198 = por %p196, %p197
      %p200 = scmp.ne.s32.totalorder %s185, %s199
      %p201 = scmp.eq.s32.totalorder %s30, 0
      %p202 = por %p200, %p201
      %s203 = ssub.s32 %s31, %s43
      %s204 = ssub.s32 %s32, %s39
      %s205 = sor.u32 %s203, %s204
      %p206 = scmp.eq.s32.totalorder %s205, 0
      %s208 = sadd.s32 %s207, 1
      %s209 = scalar_select %p206, %s207, %s208
      %p212 = pneg %p206
      %p213 = scmp.eq.s32.totalorder %s24, 1
      %p214 = por %p212, %p213
      %p215 = scmp.ne.s32.totalorder %s207, %s210
      %p216 = scmp.eq.s32.totalorder %s24, 0
      %p217 = por %p215, %p216
      %p218 = scmp.ne.s32.totalorder %s207, %s210
      %p219 = scmp.eq.s32.totalorder %s29, 1
      %p220 = por %p218, %p219
      %p221 = scmp.ne.s32.totalorder %s210, %s211
      %p222 = scmp.eq.s32.totalorder %s29, 0
      %p223 = por %p221, %p222
      %p224 = scmp.ne.s32.totalorder %s210, %s211
      %p225 = scmp.eq.s32.totalorder %s30, 1
      %p226 = por %p224, %p225
      %p228 = scmp.ne.s32.totalorder %s211, %s227
      %p229 = scmp.eq.s32.totalorder %s30, 0
      %p230 = por %p228, %p229
      %p231 = scmp.le.s32.totalorder 1, %s24
      %p232 = scmp.lt.s32.totalorder %s24, 3
      %p233 = pnand %p231, %p232
      %p234 = pneg %p233
      // Predicated region
      $region9: #{tpu_custom_call.1} parent=5 // pred_check
        _
      $region10: #{tpu_custom_call.1} parent=5 // pred_check_branch
        %236 = sbr.rel (%p233) target = $region12
      $region11: #{tpu_custom_call.1} parent=5 // pred_region
        %s237 = ssub.s32 %s24, 1
        // Predicated region
        $region13: #{tpu_custom_call.1} parent=11 // pred_check
          %p238 = pneg %p111
        $region14: #{tpu_custom_call.1} parent=11 // pred_check_branch
          %240 = sbr.rel (%p238) target = $region16
        $region15: #{tpu_custom_call.1} parent=11 // pred_region
          %s242 = ssub.s32 512, 512
          %243 = vsyncadd [#allocation8], %s242
          %s244 = sshll.u32 [#allocation9], 4
          %s245 = int_to_ptr.vmem [resolvable:$true] %s244
          %250 = dma.hbm_to_vmem [thread:$0]  %s2, 512, %s245, [#allocation8], 128, 128, 8
        $region16: #{tpu_custom_call.1} parent=11 // pred_fallthru
          _
        // Predicated region
        $region17: #{tpu_custom_call.1} parent=11 // pred_check
          %p251 = pneg %p132
        $region18: #{tpu_custom_call.1} parent=11 // pred_check_branch
          %253 = sbr.rel (%p251) target = $region20
        $region19: #{tpu_custom_call.1} parent=11 // pred_region
          %s255 = ssub.s32 384, 384
          %256 = vsyncadd [#allocation11], %s255
          %s257 = sshll.u32 [#allocation10], 4
          %s258 = int_to_ptr.vmem [resolvable:$true] %s257
          %263 = dma.hbm_to_vmem [thread:$0]  %s3, 384, %s258, [#allocation11], 128, 128, 8
        $region20: #{tpu_custom_call.1} parent=11 // pred_fallthru
          _
        // Predicated region
        $region21: #{tpu_custom_call.1} parent=11 // pred_check
          %p264 = pneg %p153
        $region22: #{tpu_custom_call.1} parent=11 // pred_check_branch
          %266 = sbr.rel (%p264) target = $region24
        $region23: #{tpu_custom_call.1} parent=11 // pred_region
          %s268 = ssub.s32 384, 384
          %269 = vsyncadd [#allocation11], %s268
          %s270 = sshll.u32 [#allocation12], 4
          %s271 = int_to_ptr.vmem [resolvable:$true] %s270
          %276 = dma.hbm_to_vmem [thread:$0]  %s4, 384, %s271, [#allocation11], 128, 128, 8
        $region24: #{tpu_custom_call.1} parent=11 // pred_fallthru
          _
        // Predicated region
        $region25: #{tpu_custom_call.1} parent=11 // pred_check
          %p277 = pneg %p174
        $region26: #{tpu_custom_call.1} parent=11 // pred_check_branch
          %279 = sbr.rel (%p277) target = $region28
        $region27: #{tpu_custom_call.1} parent=11 // pred_region
          %s281 = ssub.s32 1024, 1024
          %282 = vsyncadd [#allocation14], %s281
          %s283 = sshll.u32 [#allocation13], 4
          %s284 = int_to_ptr.vmem [resolvable:$true] %s283
          %289 = dma.hbm_to_vmem [thread:$0]  %s5, 1024, %s284, [#allocation14], 128, 128, 8
        $region28: #{tpu_custom_call.1} parent=11 // pred_fallthru
          _
        // Predicated region
        $region29: #{tpu_custom_call.1} parent=11 // pred_check
          %p290 = pneg %p195
        $region30: #{tpu_custom_call.1} parent=11 // pred_check_branch
          %292 = sbr.rel (%p290) target = $region32
        $region31: #{tpu_custom_call.1} parent=11 // pred_region
          _
        $region32: #{tpu_custom_call.1} parent=11 // pred_fallthru
          _
      $region12: #{tpu_custom_call.1} parent=5 // pred_fallthru
        _
      %p293 = scmp.lt.s32.totalorder %s24, 2
      // Predicated region
      $region33: #{tpu_custom_call.1} parent=5 // pred_check
        %p294 = pneg %p293
      $region34: #{tpu_custom_call.1} parent=5 // pred_check_branch
        %296 = sbr.rel (%p294) target = $region36
      $region35: #{tpu_custom_call.1} parent=5 // pred_region
        // Predicated region
        $region37: #{tpu_custom_call.1} parent=35 // pred_check
          %p297 = pneg %p58
        $region38: #{tpu_custom_call.1} parent=35 // pred_check_branch
          %299 = sbr.rel (%p297) target = $region40
        $region39: #{tpu_custom_call.1} parent=35 // pred_region
          %s300 = sand.u32 %s48, 1
          %s301 = scalar_lea.sflag [#allocation5], %s300
          %s302 = sand.u32 %s48, 1
          %s303 = smul.addr %s302, 16
          %s304 = scalar_lea.vmem [#allocation4], %s303
          %s305 = smul.u32 2, %s32
          %s307 = ssub.s32 256, 256
          %308 = vsyncadd %s301, %s307
          %s309 = smul.addr %s31, 2
          %s310 = sadd.s32 %s305, %s309
          %s311 = smul.addr %s310, 128
          %s312 = scalar_lea.hbm %s0, %s311
          %s313 = sshll.u32 %s304, 4
          %s314 = int_to_ptr.vmem [resolvable:$true] %s313
          %319 = dma.hbm_to_vmem [thread:$0]  %s312, 256, %s314, %s301, 128, 128, 8
        $region40: #{tpu_custom_call.1} parent=35 // pred_fallthru
          _
        // Predicated region
        $region41: #{tpu_custom_call.1} parent=35 // pred_check
          %p320 = pneg %p84
        $region42: #{tpu_custom_call.1} parent=35 // pred_check_branch
          %322 = sbr.rel (%p320) target = $region44
        $region43: #{tpu_custom_call.1} parent=35 // pred_region
          %s323 = sand.u32 %s24, 1
          %s324 = scalar_lea.sflag [#allocation8], %s323
          %s325 = sand.u32 %s74, 1
          %s326 = smul.addr %s325, 8
          %s327 = scalar_lea.vmem [#allocation7], %s326
          %s329 = ssub.s32 128, 128
          %330 = vsyncadd %s324, %s329
          %s331 = smul.addr %s31, 128
          %s332 = scalar_lea.hbm %s1, %s331
          %s334 = sshll.u32 %s327, 4
          %s335 = int_to_ptr.vmem [resolvable:$true] %s334
          %337 = dma.hbm_to_vmem [thread:$0]  %s332, 128, %s335, %s324
        $region44: #{tpu_custom_call.1} parent=35 // pred_fallthru
          _
      $region36: #{tpu_custom_call.1} parent=5 // pred_fallthru
        _
      %p338 = scmp.le.s32.totalorder 1, %s24
      %p339 = scmp.lt.s32.totalorder %s24, 3
      %p340 = pnand %p338, %p339
      %p341 = pneg %p340
      // Predicated region
      $region45: #{tpu_custom_call.1} parent=5 // pred_check
        _
      $region46: #{tpu_custom_call.1} parent=5 // pred_check_branch
        %343 = sbr.rel (%p340) target = $region48
      $region47: #{tpu_custom_call.1} parent=5 // pred_region
        %s344 = ssub.s32 %s24, 1
        %s345 = sand.u32 %s51, 1
        %s346 = scalar_lea.sflag [#allocation5], %s345
        %s347 = sand.u32 %s51, 1
        %s348 = smul.addr %s347, 16
        %s349 = scalar_lea.vmem [#allocation4], %s348
        // Predicated region
        $region49: #{tpu_custom_call.1} parent=47 // pred_check
          %p350 = pneg %p64
        $region50: #{tpu_custom_call.1} parent=47 // pred_check_branch
          %352 = sbr.rel (%p350) target = $region52
        $region51: #{tpu_custom_call.1} parent=47 // pred_region
          %353 = dma.done %s346, 256
        $region52: #{tpu_custom_call.1} parent=47 // pred_fallthru
          _
        %s354 = sand.u32 %s29, 1
        %s355 = scalar_lea.sflag [#allocation8], %s354
        %s356 = sand.u32 %s77, 1
        %s357 = smul.addr %s356, 8
        %s358 = scalar_lea.vmem [#allocation7], %s357
        // Predicated region
        $region53: #{tpu_custom_call.1} parent=47 // pred_check
          %p359 = pneg %p90
        $region54: #{tpu_custom_call.1} parent=47 // pred_check_branch
          %361 = sbr.rel (%p359) target = $region56
        $region55: #{tpu_custom_call.1} parent=47 // pred_region
          %362 = dma.done %s355, 128
        $region56: #{tpu_custom_call.1} parent=47 // pred_fallthru
          _
        // Predicated region
        $region57: #{tpu_custom_call.1} parent=47 // pred_check
          %p363 = pneg %p111
        $region58: #{tpu_custom_call.1} parent=47 // pred_check_branch
          %365 = sbr.rel (%p363) target = $region60
        $region59: #{tpu_custom_call.1} parent=47 // pred_region
          %366 = dma.done [#allocation8], 512
        $region60: #{tpu_custom_call.1} parent=47 // pred_fallthru
          _
        // Predicated region
        $region61: #{tpu_custom_call.1} parent=47 // pred_check
          %p367 = pneg %p132
        $region62: #{tpu_custom_call.1} parent=47 // pred_check_branch
          %369 = sbr.rel (%p367) target = $region64
        $region63: #{tpu_custom_call.1} parent=47 // pred_region
          %370 = dma.done [#allocation11], 384
        $region64: #{tpu_custom_call.1} parent=47 // pred_fallthru
          _
        // Predicated region
        $region65: #{tpu_custom_call.1} parent=47 // pred_check
          %p371 = pneg %p153
        $region66: #{tpu_custom_call.1} parent=47 // pred_check_branch
          %373 = sbr.rel (%p371) target = $region68
        $region67: #{tpu_custom_call.1} parent=47 // pred_region
          %374 = dma.done [#allocation11], 384
        $region68: #{tpu_custom_call.1} parent=47 // pred_fallthru
          _
        // Predicated region
        $region69: #{tpu_custom_call.1} parent=47 // pred_check
          %p375 = pneg %p174
        $region70: #{tpu_custom_call.1} parent=47 // pred_check_branch
          %377 = sbr.rel (%p375) target = $region72
        $region71: #{tpu_custom_call.1} parent=47 // pred_region
          %378 = dma.done [#allocation14], 1024
        $region72: #{tpu_custom_call.1} parent=47 // pred_fallthru
          _
        %s379 = sand.u32 %s51, 1
        %s380 = scalar_lea.sflag [#allocation5], %s379
        %s381 = sand.u32 %s51, 1
        %s382 = smul.addr %s381, 16
        %s383 = scalar_lea.vmem [#allocation4], %s382
        %p384 = pneg %p64
        %p385 = pneg %p61
        %s386 = sand.u32 %s29, 1
        %s387 = scalar_lea.sflag [#allocation8], %s386
        %s388 = sand.u32 %s77, 1
        %s389 = smul.addr %s388, 8
        %s390 = scalar_lea.vmem [#allocation7], %s389
        %p391 = pneg %p90
        %p392 = pneg %p87
        %p393 = pneg %p111
        %p394 = pneg %p108
        %p395 = pneg %p132
        %p396 = pneg %p129
        %p397 = pneg %p153
        %p398 = pneg %p150
        %p399 = pneg %p174
        %p400 = pneg %p171
        %p401 = pneg %p195
        %p402 = pneg %p192
        %p403 = pneg %p223
        %p404 = pneg %p220
        %s405 = sand.u32 %s210, 1
        %s406 = scalar_lea.sflag [#allocation6], %s405
        %s407 = sand.u32 %s210, 1
        %s408 = smul.addr %s407, 16
        %s409 = scalar_lea.vmem [#allocation15], %s408
        %s410 = smul.u32 2, %s34
        %s411 = smul.u32 2, %s34
        %v412 = vld [vmem:[%s358] sm:$0xff]
        %v413 = vld [vmem:[#allocation10] sm:$0xff]
        %v414 = vld [vmem:[#allocation10 + $0x8] sm:$0xff]
        %v415 = vld [vmem:[#allocation10 + $0x10] sm:$0xff]
        %vm416 = vcmask 195584
        %v418 = vsel %vm416, %v412, 0
        %420 = vmatprep.subr.mxu0 0.0
        %421 = vmatpush1.msra.mxu0 0.0
        %422 = vmatprep.subr.mxu0 0.0
        %423 = vmatpush1.msra.mxu0 0.0
        %424 = vmatprep.subr.mxu0 0.0
        %425 = vmatpush1.msra.mxu0 0.0
        %426 = vmatprep.subr.mxu0 0.0
        %427 = vmatpush1.msra.mxu0 0.0
        %428 = vmatprep.subr.mxu0 0.0
        %429 = vmatpush1.msra.mxu0 0.0
        %430 = vmatprep.subr.mxu0 0.0
        %431 = vmatpush1.msra.mxu0 0.0
        %432 = vmatprep.subr.mxu0 0.0
        %433 = vmatpush1.msra.mxu0 0.0
        %434 = vmatprep.subr.mxu0 0.0
        %435 = vmatpush1.msra.mxu0 0.0
        %436 = vmatprep.subr.mxu0 0.0
        %437 = vmatpush1.msra.mxu0 0.0
        %438 = vmatprep.subr.mxu0 0.0
        %439 = vmatpush1.msra.mxu0 0.0
        %440 = vmatprep.subr.mxu0 0.0
        %441 = vmatpush1.msra.mxu0 0.0
        %442 = vmatprep.subr.mxu0 0.0
        %443 = vmatpush1.msra.mxu0 0.0
        %444 = vmatprep.subr.mxu0 0.0
        %445 = vmatpush1.msra.mxu0 0.0
        %446 = vmatprep.subr.mxu0 0.0
        %447 = vmatpush1.msra.mxu0 %v415
        %448 = vmatprep.subr.mxu0 0.0
        %449 = vmatpush1.msra.mxu0 %v414
        %450 = vmatprep.subr.mxu0 0.0
        %451 = vmatpush1.msra.mxu0 %v413
        %452 = vmatprep.subr.mxu0 0.0
        %453 = vmatpush2.msra.mxu0 0.0
        %454 = vmatprep.subr.mxu0 0.0
        %455 = vmatpush2.msra.mxu0 0.0
        %456 = vmatprep.subr.mxu0 0.0
        %457 = vmatpush2.msra.mxu0 0.0
        %458 = vmatprep.subr.mxu0 0.0
        %459 = vmatpush2.msra.mxu0 0.0
        %460 = vmatprep.subr.mxu0 0.0
        %461 = vmatpush2.msra.mxu0 0.0
        %462 = vmatprep.subr.mxu0 0.0
        %463 = vmatpush2.msra.mxu0 0.0
        %464 = vmatprep.subr.mxu0 0.0
        %465 = vmatpush2.msra.mxu0 0.0
        %466 = vmatprep.subr.mxu0 0.0
        %467 = vmatpush2.msra.mxu0 0.0
        %468 = vmatprep.subr.mxu0 0.0
        %469 = vmatpush2.msra.mxu0 0.0
        %470 = vmatprep.subr.mxu0 0.0
        %471 = vmatpush2.msra.mxu0 0.0
        %472 = vmatprep.subr.mxu0 0.0
        %473 = vmatpush2.msra.mxu0 0.0
        %474 = vmatprep.subr.mxu0 0.0
        %475 = vmatpush2.msra.mxu0 0.0
        %476 = vmatprep.subr.mxu0 0.0
        %477 = vmatpush2.msra.mxu0 0.0
        %478 = vmatprep.subr.mxu0 0.0
        %479 = vmatpush2.msra.mxu0 0.0
        %480 = vmatprep.subr.mxu0 0.0
        %481 = vmatpush2.msra.mxu0 0.0
        %482 = vmatprep.subr.mxu0 0.0
        %483 = vmatpush2.msra.mxu0 0.0
        %484 = vmatprep.mubr.f32.mxu0 0.0
        %485 = vmatmul.mubr.f32.gmra.mxu0 %v418
        %v486 = vpop.f32.mrf.mxu0
        %v487 = vadd.f32 0.0, %v486
        %v488 = vpop.f32.mrf.mxu0
        %489 = vdwg.mxu0
        %v490 = vld [vmem:[#allocation12] sm:$0xff]
        %v491 = vld [vmem:[#allocation12 + $0x8] sm:$0xff]
        %v492 = vld [vmem:[#allocation12 + $0x10] sm:$0xff]
        %493 = vmatprep.subr.mxu0 0.0
        %494 = vmatpush1.msra.mxu0 0.0
        %495 = vmatprep.subr.mxu0 0.0
        %496 = vmatpush1.msra.mxu0 0.0
        %497 = vmatprep.subr.mxu0 0.0
        %498 = vmatpush1.msra.mxu0 0.0
        %499 = vmatprep.subr.mxu0 0.0
        %500 = vmatpush1.msra.mxu0 0.0
        %501 = vmatprep.subr.mxu0 0.0
        %502 = vmatpush1.msra.mxu0 0.0
        %503 = vmatprep.subr.mxu0 0.0
        %504 = vmatpush1.msra.mxu0 0.0
        %505 = vmatprep.subr.mxu0 0.0
        %506 = vmatpush1.msra.mxu0 0.0
        %507 = vmatprep.subr.mxu0 0.0
        %508 = vmatpush1.msra.mxu0 0.0
        %509 = vmatprep.subr.mxu0 0.0
        %510 = vmatpush1.msra.mxu0 0.0
        %511 = vmatprep.subr.mxu0 0.0
        %512 = vmatpush1.msra.mxu0 0.0
        %513 = vmatprep.subr.mxu0 0.0
        %514 = vmatpush1.msra.mxu0 0.0
        %515 = vmatprep.subr.mxu0 0.0
        %516 = vmatpush1.msra.mxu0 0.0
        %517 = vmatprep.subr.mxu0 0.0
        %518 = vmatpush1.msra.mxu0 0.0
        %519 = vmatprep.subr.mxu0 0.0
        %520 = vmatpush1.msra.mxu0 %v492
        %521 = vmatprep.subr.mxu0 0.0
        %522 = vmatpush1.msra.mxu0 %v491
        %523 = vmatprep.subr.mxu0 0.0
        %524 = vmatpush1.msra.mxu0 %v490
        %525 = vmatprep.subr.mxu0 0.0
        %526 = vmatpush2.msra.mxu0 0.0
        %527 = vmatprep.subr.mxu0 0.0
        %528 = vmatpush2.msra.mxu0 0.0
        %529 = vmatprep.subr.mxu0 0.0
        %530 = vmatpush2.msra.mxu0 0.0
        %531 = vmatprep.subr.mxu0 0.0
        %532 = vmatpush2.msra.mxu0 0.0
        %533 = vmatprep.subr.mxu0 0.0
        %534 = vmatpush2.msra.mxu0 0.0
        %535 = vmatprep.subr.mxu0 0.0
        %536 = vmatpush2.msra.mxu0 0.0
        %537 = vmatprep.subr.mxu0 0.0
        %538 = vmatpush2.msra.mxu0 0.0
        %539 = vmatprep.subr.mxu0 0.0
        %540 = vmatpush2.msra.mxu0 0.0
        %541 = vmatprep.subr.mxu0 0.0
        %542 = vmatpush2.msra.mxu0 0.0
        %543 = vmatprep.subr.mxu0 0.0
        %544 = vmatpush2.msra.mxu0 0.0
        %545 = vmatprep.subr.mxu0 0.0
        %546 = vmatpush2.msra.mxu0 0.0
        %547 = vmatprep.subr.mxu0 0.0
        %548 = vmatpush2.msra.mxu0 0.0
        %549 = vmatprep.subr.mxu0 0.0
        %550 = vmatpush2.msra.mxu0 0.0
        %551 = vmatprep.subr.mxu0 0.0
        %552 = vmatpush2.msra.mxu0 0.0
        %553 = vmatprep.subr.mxu0 0.0
        %554 = vmatpush2.msra.mxu0 0.0
        %555 = vmatprep.subr.mxu0 0.0
        %556 = vmatpush2.msra.mxu0 0.0
        %557 = vmatprep.mubr.f32.mxu0 0.0
        %558 = vmatmul.mubr.f32.gmra.mxu0 %v418
        %v559 = vpop.f32.mrf.mxu0
        %v560 = vadd.f32 0.0, %v559
        %v561 = vpop.f32.mrf.mxu0
        %562 = vdwg.mxu0
        %vm563 = vcmask 130048
        %564 = vst.msk [vmem:[#allocation2] sm:$0xff] %vm563, %v487
        %565 = vst.msk [vmem:[#allocation3] sm:$0xff] %vm563, %v560
        %567 = vrot.lane.b32.xlu0 %v487, 112
        %v568 = vpop.permute.xlu0 %567
        %s570 = scalar_lea.vmem [#allocation2], 8
        %571 = vst.msk [vmem:[%s570] sm:$0xff] %vm563, %v568
        %573 = vrot.lane.b32.xlu0 %v560, 112
        %v574 = vpop.permute.xlu0 %573
        %s576 = scalar_lea.vmem [#allocation3], 8
        %577 = vst.msk [vmem:[%s576] sm:$0xff] %vm563, %v574
        %578 = vrot.lane.b32.xlu0 %v487, 96
        %v579 = vpop.permute.xlu0 %578
        %s581 = scalar_lea.vmem [#allocation2], 16
        %582 = vst.msk [vmem:[%s581] sm:$0xff] %vm563, %v579
        %583 = vrot.lane.b32.xlu0 %v560, 96
        %v584 = vpop.permute.xlu0 %583
        %s586 = scalar_lea.vmem [#allocation3], 16
        %587 = vst.msk [vmem:[%s586] sm:$0xff] %vm563, %v584
        %588 = vrot.lane.b32.xlu0 %v487, 80
        %v589 = vpop.permute.xlu0 %588
        %s591 = scalar_lea.vmem [#allocation2], 24
        %592 = vst.msk [vmem:[%s591] sm:$0xff] %vm563, %v589
        %593 = vrot.lane.b32.xlu0 %v560, 80
        %v594 = vpop.permute.xlu0 %593
        %s596 = scalar_lea.vmem [#allocation3], 24
        %597 = vst.msk [vmem:[%s596] sm:$0xff] %vm563, %v594
        %v598 = vld [vmem:[%s349] sm:$0xff]
        %v599 = vld [vmem:[%s349 + $0x8] sm:$0xff]
        %v600 = vld [vmem:[#allocation9] sm:$0xff]
        %v601 = vld [vmem:[#allocation9 + $0x8] sm:$0xff]
        %v602 = vld [vmem:[#allocation9 + $0x10] sm:$0xff]
        %v603 = vld [vmem:[#allocation9 + $0x18] sm:$0xff]
        %vm604 = vcmask 261120
        %v606 = vsel %vm604, %v598, 0
        %v609 = vsel %vm604, %v599, 0
        %611 = vmatprep.subr.mxu0 0.0
        %612 = vmatpush1.msra.mxu0 0.0
        %613 = vmatprep.subr.mxu0 0.0
        %614 = vmatpush1.msra.mxu0 0.0
        %615 = vmatprep.subr.mxu0 0.0
        %616 = vmatpush1.msra.mxu0 0.0
        %617 = vmatprep.subr.mxu0 0.0
        %618 = vmatpush1.msra.mxu0 0.0
        %619 = vmatprep.subr.mxu0 0.0
        %620 = vmatpush1.msra.mxu0 0.0
        %621 = vmatprep.subr.mxu0 0.0
        %622 = vmatpush1.msra.mxu0 0.0
        %623 = vmatprep.subr.mxu0 0.0
        %624 = vmatpush1.msra.mxu0 0.0
        %625 = vmatprep.subr.mxu0 0.0
        %626 = vmatpush1.msra.mxu0 0.0
        %627 = vmatprep.subr.mxu0 0.0
        %628 = vmatpush1.msra.mxu0 0.0
        %629 = vmatprep.subr.mxu0 0.0
        %630 = vmatpush1.msra.mxu0 0.0
        %631 = vmatprep.subr.mxu0 0.0
        %632 = vmatpush1.msra.mxu0 0.0
        %633 = vmatprep.subr.mxu0 0.0
        %634 = vmatpush1.msra.mxu0 0.0
        %635 = vmatprep.subr.mxu0 0.0
        %636 = vmatpush1.msra.mxu0 %v603
        %637 = vmatprep.subr.mxu0 0.0
        %638 = vmatpush1.msra.mxu0 %v602
        %639 = vmatprep.subr.mxu0 0.0
        %640 = vmatpush1.msra.mxu0 %v601
        %641 = vmatprep.subr.mxu0 0.0
        %642 = vmatpush1.msra.mxu0 %v600
        %643 = vmatprep.subr.mxu0 0.0
        %644 = vmatpush2.msra.mxu0 0.0
        %645 = vmatprep.subr.mxu0 0.0
        %646 = vmatpush2.msra.mxu0 0.0
        %647 = vmatprep.subr.mxu0 0.0
        %648 = vmatpush2.msra.mxu0 0.0
        %649 = vmatprep.subr.mxu0 0.0
        %650 = vmatpush2.msra.mxu0 0.0
        %651 = vmatprep.subr.mxu0 0.0
        %652 = vmatpush2.msra.mxu0 0.0
        %653 = vmatprep.subr.mxu0 0.0
        %654 = vmatpush2.msra.mxu0 0.0
        %655 = vmatprep.subr.mxu0 0.0
        %656 = vmatpush2.msra.mxu0 0.0
        %657 = vmatprep.subr.mxu0 0.0
        %658 = vmatpush2.msra.mxu0 0.0
        %659 = vmatprep.subr.mxu0 0.0
        %660 = vmatpush2.msra.mxu0 0.0
        %661 = vmatprep.subr.mxu0 0.0
        %662 = vmatpush2.msra.mxu0 0.0
        %663 = vmatprep.subr.mxu0 0.0
        %664 = vmatpush2.msra.mxu0 0.0
        %665 = vmatprep.subr.mxu0 0.0
        %666 = vmatpush2.msra.mxu0 0.0
        %667 = vmatprep.subr.mxu0 0.0
        %668 = vmatpush2.msra.mxu0 0.0
        %669 = vmatprep.subr.mxu0 0.0
        %670 = vmatpush2.msra.mxu0 0.0
        %671 = vmatprep.subr.mxu0 0.0
        %672 = vmatpush2.msra.mxu0 0.0
        %673 = vmatprep.subr.mxu0 0.0
        %674 = vmatpush2.msra.mxu0 0.0
        %675 = vmatprep.mubr.f32.mxu0 0.0
        %676 = vmatmul.mubr.f32.gmra.mxu0 %v606
        %v677 = vpop.f32.mrf.mxu0
        %v678 = vadd.f32 0.0, %v677
        %v679 = vpop.f32.mrf.mxu0
        %680 = vmatprep.mubr.f32.mxu0 0.0
        %681 = vmatmul.mubr.f32.gmra.mxu0 %v609
        %v682 = vpop.f32.mrf.mxu0
        %v683 = vadd.f32 0.0, %v682
        %v684 = vpop.f32.mrf.mxu0
        %685 = vdwg.mxu0
        %688 = vrot.lane.b32.xlu0 %v678, 112
        %v689 = vpop.permute.xlu0 %688
        %690 = vrot.lane.b32.xlu0 %v683, 112
        %v691 = vpop.permute.xlu0 %690
        %692 = vrot.lane.b32.xlu0 %v678, 96
        %v693 = vpop.permute.xlu0 %692
        %694 = vrot.lane.b32.xlu0 %v683, 96
        %v695 = vpop.permute.xlu0 %694
        %696 = vrot.lane.b32.xlu0 %v678, 80
        %v697 = vpop.permute.xlu0 %696
        %698 = vrot.lane.b32.xlu0 %v683, 80
        %v699 = vpop.permute.xlu0 %698
        %v700 = vld [vmem:[#allocation2] sm:$0xff]
        %v701 = vld [vmem:[#allocation2 + $0x8] sm:$0xff]
        %v702 = vld [vmem:[#allocation2 + $0x10] sm:$0xff]
        %v703 = vld [vmem:[#allocation2 + $0x18] sm:$0xff]
        %v704 = vsel %vm563, %v678, 0
        %v706 = vsel %vm563, %v683, 0
        %v709 = vsel %vm563, %v700, 0
        %711 = vmatprep.subr.mxu0 0.0
        %712 = vmatpush1.xpose.msra.mxu0 0.0
        %713 = vmatprep.subr.mxu0 0.0
        %714 = vmatpush1.xpose.msra.mxu0 0.0
        %715 = vmatprep.subr.mxu0 0.0
        %716 = vmatpush1.xpose.msra.mxu0 0.0
        %717 = vmatprep.subr.mxu0 0.0
        %718 = vmatpush1.xpose.msra.mxu0 0.0
        %719 = vmatprep.subr.mxu0 0.0
        %720 = vmatpush1.xpose.msra.mxu0 0.0
        %721 = vmatprep.subr.mxu0 0.0
        %722 = vmatpush1.xpose.msra.mxu0 0.0
        %723 = vmatprep.subr.mxu0 0.0
        %724 = vmatpush1.xpose.msra.mxu0 0.0
        %725 = vmatprep.subr.mxu0 0.0
        %726 = vmatpush1.xpose.msra.mxu0 0.0
        %727 = vmatprep.subr.mxu0 0.0
        %728 = vmatpush1.xpose.msra.mxu0 0.0
        %729 = vmatprep.subr.mxu0 0.0
        %730 = vmatpush1.xpose.msra.mxu0 0.0
        %731 = vmatprep.subr.mxu0 0.0
        %732 = vmatpush1.xpose.msra.mxu0 0.0
        %733 = vmatprep.subr.mxu0 0.0
        %734 = vmatpush1.xpose.msra.mxu0 0.0
        %735 = vmatprep.subr.mxu0 0.0
        %736 = vmatpush1.xpose.msra.mxu0 0.0
        %737 = vmatprep.subr.mxu0 0.0
        %738 = vmatpush1.xpose.msra.mxu0 0.0
        %739 = vmatprep.subr.mxu0 0.0
        %740 = vmatpush1.xpose.msra.mxu0 0.0
        %741 = vmatprep.subr.mxu0 0.0
        %742 = vmatpush1.xpose.msra.mxu0 %v709
        %743 = vmatprep.subr.mxu0 0.0
        %744 = vmatpush2.xpose.msra.mxu0 0.0
        %745 = vmatprep.subr.mxu0 0.0
        %746 = vmatpush2.xpose.msra.mxu0 0.0
        %747 = vmatprep.subr.mxu0 0.0
        %748 = vmatpush2.xpose.msra.mxu0 0.0
        %749 = vmatprep.subr.mxu0 0.0
        %750 = vmatpush2.xpose.msra.mxu0 0.0
        %751 = vmatprep.subr.mxu0 0.0
        %752 = vmatpush2.xpose.msra.mxu0 0.0
        %753 = vmatprep.subr.mxu0 0.0
        %754 = vmatpush2.xpose.msra.mxu0 0.0
        %755 = vmatprep.subr.mxu0 0.0
        %756 = vmatpush2.xpose.msra.mxu0 0.0
        %757 = vmatprep.subr.mxu0 0.0
        %758 = vmatpush2.xpose.msra.mxu0 0.0
        %759 = vmatprep.subr.mxu0 0.0
        %760 = vmatpush2.xpose.msra.mxu0 0.0
        %761 = vmatprep.subr.mxu0 0.0
        %762 = vmatpush2.xpose.msra.mxu0 0.0
        %763 = vmatprep.subr.mxu0 0.0
        %764 = vmatpush2.xpose.msra.mxu0 0.0
        %765 = vmatprep.subr.mxu0 0.0
        %766 = vmatpush2.xpose.msra.mxu0 0.0
        %767 = vmatprep.subr.mxu0 0.0
        %768 = vmatpush2.xpose.msra.mxu0 0.0
        %769 = vmatprep.subr.mxu0 0.0
        %770 = vmatpush2.xpose.msra.mxu0 0.0
        %771 = vmatprep.subr.mxu0 0.0
        %772 = vmatpush2.xpose.msra.mxu0 0.0
        %773 = vmatprep.subr.mxu0 0.0
        %774 = vmatpush2.xpose.msra.mxu0 0.0
        %775 = vmatprep.mubr.f32.mxu0 0.0
        %776 = vmatmul.mubr.f32.gmra.mxu0 %v704
        %v777 = vpop.f32.mrf.mxu0
        %v778 = vadd.f32 0.0, %v777
        %v779 = vpop.f32.mrf.mxu0
        %780 = vmatprep.mubr.f32.mxu0 0.0
        %781 = vmatmul.mubr.f32.gmra.mxu0 %v706
        %v782 = vpop.f32.mrf.mxu0
        %v783 = vadd.f32 0.0, %v782
        %v784 = vpop.f32.mrf.mxu0
        %785 = vdwg.mxu0
        %v786 = vsel %vm563, %v689, 0
        %v788 = vsel %vm563, %v691, 0
        %v791 = vsel %vm563, %v701, 0
        %793 = vmatprep.subr.mxu0 0.0
        %794 = vmatpush1.xpose.msra.mxu0 0.0
        %795 = vmatprep.subr.mxu0 0.0
        %796 = vmatpush1.xpose.msra.mxu0 0.0
        %797 = vmatprep.subr.mxu0 0.0
        %798 = vmatpush1.xpose.msra.mxu0 0.0
        %799 = vmatprep.subr.mxu0 0.0
        %800 = vmatpush1.xpose.msra.mxu0 0.0
        %801 = vmatprep.subr.mxu0 0.0
        %802 = vmatpush1.xpose.msra.mxu0 0.0
        %803 = vmatprep.subr.mxu0 0.0
        %804 = vmatpush1.xpose.msra.mxu0 0.0
        %805 = vmatprep.subr.mxu0 0.0
        %806 = vmatpush1.xpose.msra.mxu0 0.0
        %807 = vmatprep.subr.mxu0 0.0
        %808 = vmatpush1.xpose.msra.mxu0 0.0
        %809 = vmatprep.subr.mxu0 0.0
        %810 = vmatpush1.xpose.msra.mxu0 0.0
        %811 = vmatprep.subr.mxu0 0.0
        %812 = vmatpush1.xpose.msra.mxu0 0.0
        %813 = vmatprep.subr.mxu0 0.0
        %814 = vmatpush1.xpose.msra.mxu0 0.0
        %815 = vmatprep.subr.mxu0 0.0
        %816 = vmatpush1.xpose.msra.mxu0 0.0
        %817 = vmatprep.subr.mxu0 0.0
        %818 = vmatpush1.xpose.msra.mxu0 0.0
        %819 = vmatprep.subr.mxu0 0.0
        %820 = vmatpush1.xpose.msra.mxu0 0.0
        %821 = vmatprep.subr.mxu0 0.0
        %822 = vmatpush1.xpose.msra.mxu0 0.0
        %823 = vmatprep.subr.mxu0 0.0
        %824 = vmatpush1.xpose.msra.mxu0 %v791
        %825 = vmatprep.subr.mxu0 0.0
        %826 = vmatpush2.xpose.msra.mxu0 0.0
        %827 = vmatprep.subr.mxu0 0.0
        %828 = vmatpush2.xpose.msra.mxu0 0.0
        %829 = vmatprep.subr.mxu0 0.0
        %830 = vmatpush2.xpose.msra.mxu0 0.0
        %831 = vmatprep.subr.mxu0 0.0
        %832 = vmatpush2.xpose.msra.mxu0 0.0
        %833 = vmatprep.subr.mxu0 0.0
        %834 = vmatpush2.xpose.msra.mxu0 0.0
        %835 = vmatprep.subr.mxu0 0.0
        %836 = vmatpush2.xpose.msra.mxu0 0.0
        %837 = vmatprep.subr.mxu0 0.0
        %838 = vmatpush2.xpose.msra.mxu0 0.0
        %839 = vmatprep.subr.mxu0 0.0
        %840 = vmatpush2.xpose.msra.mxu0 0.0
        %841 = vmatprep.subr.mxu0 0.0
        %842 = vmatpush2.xpose.msra.mxu0 0.0
        %843 = vmatprep.subr.mxu0 0.0
        %844 = vmatpush2.xpose.msra.mxu0 0.0
        %845 = vmatprep.subr.mxu0 0.0
        %846 = vmatpush2.xpose.msra.mxu0 0.0
        %847 = vmatprep.subr.mxu0 0.0
        %848 = vmatpush2.xpose.msra.mxu0 0.0
        %849 = vmatprep.subr.mxu0 0.0
        %850 = vmatpush2.xpose.msra.mxu0 0.0
        %851 = vmatprep.subr.mxu0 0.0
        %852 = vmatpush2.xpose.msra.mxu0 0.0
        %853 = vmatprep.subr.mxu0 0.0
        %854 = vmatpush2.xpose.msra.mxu0 0.0
        %855 = vmatprep.subr.mxu0 0.0
        %856 = vmatpush2.xpose.msra.mxu0 0.0
        %857 = vmatprep.mubr.f32.mxu0 0.0
        %858 = vmatmul.mubr.f32.gmra.mxu0 %v786
        %v859 = vpop.f32.mrf.mxu0
        %v860 = vadd.f32 0.0, %v859
        %v861 = vpop.f32.mrf.mxu0
        %862 = vmatprep.mubr.f32.mxu0 0.0
        %863 = vmatmul.mubr.f32.gmra.mxu0 %v788
        %v864 = vpop.f32.mrf.mxu0
        %v865 = vadd.f32 0.0, %v864
        %v866 = vpop.f32.mrf.mxu0
        %867 = vdwg.mxu0
        %v868 = vsel %vm563, %v693, 0
        %v870 = vsel %vm563, %v695, 0
        %v873 = vsel %vm563, %v702, 0
        %875 = vmatprep.subr.mxu0 0.0
        %876 = vmatpush1.xpose.msra.mxu0 0.0
        %877 = vmatprep.subr.mxu0 0.0
        %878 = vmatpush1.xpose.msra.mxu0 0.0
        %879 = vmatprep.subr.mxu0 0.0
        %880 = vmatpush1.xpose.msra.mxu0 0.0
        %881 = vmatprep.subr.mxu0 0.0
        %882 = vmatpush1.xpose.msra.mxu0 0.0
        %883 = vmatprep.subr.mxu0 0.0
        %884 = vmatpush1.xpose.msra.mxu0 0.0
        %885 = vmatprep.subr.mxu0 0.0
        %886 = vmatpush1.xpose.msra.mxu0 0.0
        %887 = vmatprep.subr.mxu0 0.0
        %888 = vmatpush1.xpose.msra.mxu0 0.0
        %889 = vmatprep.subr.mxu0 0.0
        %890 = vmatpush1.xpose.msra.mxu0 0.0
        %891 = vmatprep.subr.mxu0 0.0
        %892 = vmatpush1.xpose.msra.mxu0 0.0
        %893 = vmatprep.subr.mxu0 0.0
        %894 = vmatpush1.xpose.msra.mxu0 0.0
        %895 = vmatprep.subr.mxu0 0.0
        %896 = vmatpush1.xpose.msra.mxu0 0.0
        %897 = vmatprep.subr.mxu0 0.0
        %898 = vmatpush1.xpose.msra.mxu0 0.0
        %899 = vmatprep.subr.mxu0 0.0
        %900 = vmatpush1.xpose.msra.mxu0 0.0
        %901 = vmatprep.subr.mxu0 0.0
        %902 = vmatpush1.xpose.msra.mxu0 0.0
        %903 = vmatprep.subr.mxu0 0.0
        %904 = vmatpush1.xpose.msra.mxu0 0.0
        %905 = vmatprep.subr.mxu0 0.0
        %906 = vmatpush1.xpose.msra.mxu0 %v873
        %907 = vmatprep.subr.mxu0 0.0
        %908 = vmatpush2.xpose.msra.mxu0 0.0
        %909 = vmatprep.subr.mxu0 0.0
        %910 = vmatpush2.xpose.msra.mxu0 0.0
        %911 = vmatprep.subr.mxu0 0.0
        %912 = vmatpush2.xpose.msra.mxu0 0.0
        %913 = vmatprep.subr.mxu0 0.0
        %914 = vmatpush2.xpose.msra.mxu0 0.0
        %915 = vmatprep.subr.mxu0 0.0
        %916 = vmatpush2.xpose.msra.mxu0 0.0
        %917 = vmatprep.subr.mxu0 0.0
        %918 = vmatpush2.xpose.msra.mxu0 0.0
        %919 = vmatprep.subr.mxu0 0.0
        %920 = vmatpush2.xpose.msra.mxu0 0.0
        %921 = vmatprep.subr.mxu0 0.0
        %922 = vmatpush2.xpose.msra.mxu0 0.0
        %923 = vmatprep.subr.mxu0 0.0
        %924 = vmatpush2.xpose.msra.mxu0 0.0
        %925 = vmatprep.subr.mxu0 0.0
        %926 = vmatpush2.xpose.msra.mxu0 0.0
        %927 = vmatprep.subr.mxu0 0.0
        %928 = vmatpush2.xpose.msra.mxu0 0.0
        %929 = vmatprep.subr.mxu0 0.0
        %930 = vmatpush2.xpose.msra.mxu0 0.0
        %931 = vmatprep.subr.mxu0 0.0
        %932 = vmatpush2.xpose.msra.mxu0 0.0
        %933 = vmatprep.subr.mxu0 0.0
        %934 = vmatpush2.xpose.msra.mxu0 0.0
        %935 = vmatprep.subr.mxu0 0.0
        %936 = vmatpush2.xpose.msra.mxu0 0.0
        %937 = vmatprep.subr.mxu0 0.0
        %938 = vmatpush2.xpose.msra.mxu0 0.0
        %939 = vmatprep.mubr.f32.mxu0 0.0
        %940 = vmatmul.mubr.f32.gmra.mxu0 %v868
        %v941 = vpop.f32.mrf.mxu0
        %v942 = vadd.f32 0.0, %v941
        %v943 = vpop.f32.mrf.mxu0
        %944 = vmatprep.mubr.f32.mxu0 0.0
        %945 = vmatmul.mubr.f32.gmra.mxu0 %v870
        %v946 = vpop.f32.mrf.mxu0
        %v947 = vadd.f32 0.0, %v946
        %v948 = vpop.f32.mrf.mxu0
        %949 = vdwg.mxu0
        %v950 = vsel %vm563, %v697, 0
        %v952 = vsel %vm563, %v699, 0
        %v955 = vsel %vm563, %v703, 0
        %957 = vmatprep.subr.mxu0 0.0
        %958 = vmatpush1.xpose.msra.mxu0 0.0
        %959 = vmatprep.subr.mxu0 0.0
        %960 = vmatpush1.xpose.msra.mxu0 0.0
        %961 = vmatprep.subr.mxu0 0.0
        %962 = vmatpush1.xpose.msra.mxu0 0.0
        %963 = vmatprep.subr.mxu0 0.0
        %964 = vmatpush1.xpose.msra.mxu0 0.0
        %965 = vmatprep.subr.mxu0 0.0
        %966 = vmatpush1.xpose.msra.mxu0 0.0
        %967 = vmatprep.subr.mxu0 0.0
        %968 = vmatpush1.xpose.msra.mxu0 0.0
        %969 = vmatprep.subr.mxu0 0.0
        %970 = vmatpush1.xpose.msra.mxu0 0.0
        %971 = vmatprep.subr.mxu0 0.0
        %972 = vmatpush1.xpose.msra.mxu0 0.0
        %973 = vmatprep.subr.mxu0 0.0
        %974 = vmatpush1.xpose.msra.mxu0 0.0
        %975 = vmatprep.subr.mxu0 0.0
        %976 = vmatpush1.xpose.msra.mxu0 0.0
        %977 = vmatprep.subr.mxu0 0.0
        %978 = vmatpush1.xpose.msra.mxu0 0.0
        %979 = vmatprep.subr.mxu0 0.0
        %980 = vmatpush1.xpose.msra.mxu0 0.0
        %981 = vmatprep.subr.mxu0 0.0
        %982 = vmatpush1.xpose.msra.mxu0 0.0
        %983 = vmatprep.subr.mxu0 0.0
        %984 = vmatpush1.xpose.msra.mxu0 0.0
        %985 = vmatprep.subr.mxu0 0.0
        %986 = vmatpush1.xpose.msra.mxu0 0.0
        %987 = vmatprep.subr.mxu0 0.0
        %988 = vmatpush1.xpose.msra.mxu0 %v955
        %989 = vmatprep.subr.mxu0 0.0
        %990 = vmatpush2.xpose.msra.mxu0 0.0
        %991 = vmatprep.subr.mxu0 0.0
        %992 = vmatpush2.xpose.msra.mxu0 0.0
        %993 = vmatprep.subr.mxu0 0.0
        %994 = vmatpush2.xpose.msra.mxu0 0.0
        %995 = vmatprep.subr.mxu0 0.0
        %996 = vmatpush2.xpose.msra.mxu0 0.0
        %997 = vmatprep.subr.mxu0 0.0
        %998 = vmatpush2.xpose.msra.mxu0 0.0
        %999 = vmatprep.subr.mxu0 0.0
        %1000 = vmatpush2.xpose.msra.mxu0 0.0
        %1001 = vmatprep.subr.mxu0 0.0
        %1002 = vmatpush2.xpose.msra.mxu0 0.0
        %1003 = vmatprep.subr.mxu0 0.0
        %1004 = vmatpush2.xpose.msra.mxu0 0.0
        %1005 = vmatprep.subr.mxu0 0.0
        %1006 = vmatpush2.xpose.msra.mxu0 0.0
        %1007 = vmatprep.subr.mxu0 0.0
        %1008 = vmatpush2.xpose.msra.mxu0 0.0
        %1009 = vmatprep.subr.mxu0 0.0
        %1010 = vmatpush2.xpose.msra.mxu0 0.0
        %1011 = vmatprep.subr.mxu0 0.0
        %1012 = vmatpush2.xpose.msra.mxu0 0.0
        %1013 = vmatprep.subr.mxu0 0.0
        %1014 = vmatpush2.xpose.msra.mxu0 0.0
        %1015 = vmatprep.subr.mxu0 0.0
        %1016 = vmatpush2.xpose.msra.mxu0 0.0
        %1017 = vmatprep.subr.mxu0 0.0
        %1018 = vmatpush2.xpose.msra.mxu0 0.0
        %1019 = vmatprep.subr.mxu0 0.0
        %1020 = vmatpush2.xpose.msra.mxu0 0.0
        %1021 = vmatprep.mubr.f32.mxu0 0.0
        %1022 = vmatmul.mubr.f32.gmra.mxu0 %v950
        %v1023 = vpop.f32.mrf.mxu0
        %v1024 = vadd.f32 0.0, %v1023
        %v1025 = vpop.f32.mrf.mxu0
        %1026 = vmatprep.mubr.f32.mxu0 0.0
        %1027 = vmatmul.mubr.f32.gmra.mxu0 %v952
        %v1028 = vpop.f32.mrf.mxu0
        %v1029 = vadd.f32 0.0, %v1028
        %v1030 = vpop.f32.mrf.mxu0
        %1031 = vdwg.mxu0
        %vm1032 = vcmask 64512
        %v1033 = vsel %vm1032, %v778, -inf
        %1034 = vmax.xlane.f32.xlu0 %v1033
        %v1035 = vpop.xlane.xlu0 %1034
        %v1036 = vsel %vm1032, %v783, -inf
        %1037 = vmax.xlane.f32.xlu0 %v1036
        %v1038 = vpop.xlane.xlu0 %1037
        %v1039 = vsel %vm1032, %v860, -inf
        %1040 = vmax.xlane.f32.xlu0 %v1039
        %v1041 = vpop.xlane.xlu0 %1040
        %v1042 = vsel %vm1032, %v865, -inf
        %1043 = vmax.xlane.f32.xlu0 %v1042
        %v1044 = vpop.xlane.xlu0 %1043
        %v1045 = vsel %vm1032, %v942, -inf
        %1046 = vmax.xlane.f32.xlu0 %v1045
        %v1047 = vpop.xlane.xlu0 %1046
        %v1048 = vsel %vm1032, %v947, -inf
        %1049 = vmax.xlane.f32.xlu0 %v1048
        %v1050 = vpop.xlane.xlu0 %1049
        %v1051 = vsel %vm1032, %v1024, -inf
        %1052 = vmax.xlane.f32.xlu0 %v1051
        %v1053 = vpop.xlane.xlu0 %1052
        %v1054 = vsel %vm1032, %v1029, -inf
        %1055 = vmax.xlane.f32.xlu0 %v1054
        %v1056 = vpop.xlane.xlu0 %1055
        %v1057 = vsub.f32 %v778, %v1035
        %v1058 = vsub.f32 %v783, %v1038
        %v1059 = vsub.f32 %v860, %v1041
        %v1060 = vsub.f32 %v865, %v1044
        %v1061 = vsub.f32 %v942, %v1047
        %v1062 = vsub.f32 %v947, %v1050
        %v1063 = vsub.f32 %v1024, %v1053
        %v1064 = vsub.f32 %v1029, %v1056
        %v1065 = vmul.f32 %v1057, 1.442695
        %v1066 = vpow.pop %v1065
        %v1067 = vmul.f32 %v1058, 1.442695
        %v1068 = vpow.pop %v1067
        %v1069 = vmul.f32 %v1059, 1.442695
        %v1070 = vpow.pop %v1069
        %v1071 = vmul.f32 %v1060, 1.442695
        %v1072 = vpow.pop %v1071
        %v1073 = vmul.f32 %v1061, 1.442695
        %v1074 = vpow.pop %v1073
        %v1075 = vmul.f32 %v1062, 1.442695
        %v1076 = vpow.pop %v1075
        %v1077 = vmul.f32 %v1063, 1.442695
        %v1078 = vpow.pop %v1077
        %v1079 = vmul.f32 %v1064, 1.442695
        %v1080 = vpow.pop %v1079
        %v1081 = vsel %vm1032, %v1066, 0.0
        %1082 = vadd.xlane.f32.xlu0 %v1081
        %v1083 = vpop.xlane.xlu0 %1082
        %v1084 = vsel %vm1032, %v1068, 0.0
        %1085 = vadd.xlane.f32.xlu0 %v1084
        %v1086 = vpop.xlane.xlu0 %1085
        %v1087 = vsel %vm1032, %v1070, 0.0
        %1088 = vadd.xlane.f32.xlu0 %v1087
        %v1089 = vpop.xlane.xlu0 %1088
        %v1090 = vsel %vm1032, %v1072, 0.0
        %1091 = vadd.xlane.f32.xlu0 %v1090
        %v1092 = vpop.xlane.xlu0 %1091
        %v1093 = vsel %vm1032, %v1074, 0.0
        %1094 = vadd.xlane.f32.xlu0 %v1093
        %v1095 = vpop.xlane.xlu0 %1094
        %v1096 = vsel %vm1032, %v1076, 0.0
        %1097 = vadd.xlane.f32.xlu0 %v1096
        %v1098 = vpop.xlane.xlu0 %1097
        %v1099 = vsel %vm1032, %v1078, 0.0
        %1100 = vadd.xlane.f32.xlu0 %v1099
        %v1101 = vpop.xlane.xlu0 %1100
        %v1102 = vsel %vm1032, %v1080, 0.0
        %1103 = vadd.xlane.f32.xlu0 %v1102
        %v1104 = vpop.xlane.xlu0 %1103
        %v1105 = vld [vmem:[#allocation3] sm:$0xff]
        %v1106 = vld [vmem:[#allocation3 + $0x8] sm:$0xff]
        %v1107 = vld [vmem:[#allocation3 + $0x10] sm:$0xff]
        %v1108 = vld [vmem:[#allocation3 + $0x18] sm:$0xff]
        %v1110 = vsel %vm1032, %v1066, 0
        %v1113 = vsel %vm1032, %v1068, 0
        %1115 = vmatprep.subr.mxu0 0.0
        %1116 = vmatpush1.msra.mxu0 0.0
        %1117 = vmatprep.subr.mxu0 0.0
        %1118 = vmatpush1.msra.mxu0 0.0
        %1119 = vmatprep.subr.mxu0 0.0
        %1120 = vmatpush1.msra.mxu0 0.0
        %1121 = vmatprep.subr.mxu0 0.0
        %1122 = vmatpush1.msra.mxu0 0.0
        %1123 = vmatprep.subr.mxu0 0.0
        %1124 = vmatpush1.msra.mxu0 0.0
        %1125 = vmatprep.subr.mxu0 0.0
        %1126 = vmatpush1.msra.mxu0 0.0
        %1127 = vmatprep.subr.mxu0 0.0
        %1128 = vmatpush1.msra.mxu0 0.0
        %1129 = vmatprep.subr.mxu0 0.0
        %1130 = vmatpush1.msra.mxu0 0.0
        %1131 = vmatprep.subr.mxu0 0.0
        %1132 = vmatpush1.msra.mxu0 0.0
        %1133 = vmatprep.subr.mxu0 0.0
        %1134 = vmatpush1.msra.mxu0 0.0
        %1135 = vmatprep.subr.mxu0 0.0
        %1136 = vmatpush1.msra.mxu0 0.0
        %1137 = vmatprep.subr.mxu0 0.0
        %1138 = vmatpush1.msra.mxu0 0.0
        %1139 = vmatprep.subr.mxu0 0.0
        %1140 = vmatpush1.msra.mxu0 0.0
        %1141 = vmatprep.subr.mxu0 0.0
        %1142 = vmatpush1.msra.mxu0 0.0
        %1143 = vmatprep.subr.mxu0 0.0
        %1144 = vmatpush1.msra.mxu0 0.0
        %1145 = vmatprep.subr.mxu0 0.0
        %1146 = vmatpush1.msra.mxu0 %v1105
        %1147 = vmatprep.subr.mxu0 0.0
        %1148 = vmatpush2.msra.mxu0 0.0
        %1149 = vmatprep.subr.mxu0 0.0
        %1150 = vmatpush2.msra.mxu0 0.0
        %1151 = vmatprep.subr.mxu0 0.0
        %1152 = vmatpush2.msra.mxu0 0.0
        %1153 = vmatprep.subr.mxu0 0.0
        %1154 = vmatpush2.msra.mxu0 0.0
        %1155 = vmatprep.subr.mxu0 0.0
        %1156 = vmatpush2.msra.mxu0 0.0
        %1157 = vmatprep.subr.mxu0 0.0
        %1158 = vmatpush2.msra.mxu0 0.0
        %1159 = vmatprep.subr.mxu0 0.0
        %1160 = vmatpush2.msra.mxu0 0.0
        %1161 = vmatprep.subr.mxu0 0.0
        %1162 = vmatpush2.msra.mxu0 0.0
        %1163 = vmatprep.subr.mxu0 0.0
        %1164 = vmatpush2.msra.mxu0 0.0
        %1165 = vmatprep.subr.mxu0 0.0
        %1166 = vmatpush2.msra.mxu0 0.0
        %1167 = vmatprep.subr.mxu0 0.0
        %1168 = vmatpush2.msra.mxu0 0.0
        %1169 = vmatprep.subr.mxu0 0.0
        %1170 = vmatpush2.msra.mxu0 0.0
        %1171 = vmatprep.subr.mxu0 0.0
        %1172 = vmatpush2.msra.mxu0 0.0
        %1173 = vmatprep.subr.mxu0 0.0
        %1174 = vmatpush2.msra.mxu0 0.0
        %1175 = vmatprep.subr.mxu0 0.0
        %1176 = vmatpush2.msra.mxu0 0.0
        %1177 = vmatprep.subr.mxu0 0.0
        %1178 = vmatpush2.msra.mxu0 0.0
        %1179 = vmatprep.mubr.f32.mxu0 0.0
        %1180 = vmatmul.mubr.f32.gmra.mxu0 %v1110
        %v1181 = vpop.f32.mrf.mxu0
        %v1182 = vadd.f32 0.0, %v1181
        %v1183 = vpop.f32.mrf.mxu0
        %1184 = vmatprep.mubr.f32.mxu0 0.0
        %1185 = vmatmul.mubr.f32.gmra.mxu0 %v1113
        %v1186 = vpop.f32.mrf.mxu0
        %v1187 = vadd.f32 0.0, %v1186
        %v1188 = vpop.f32.mrf.mxu0
        %1189 = vdwg.mxu0
        %v1191 = vsel %vm1032, %v1070, 0
        %v1194 = vsel %vm1032, %v1072, 0
        %1196 = vmatprep.subr.mxu0 0.0
        %1197 = vmatpush1.msra.mxu0 0.0
        %1198 = vmatprep.subr.mxu0 0.0
        %1199 = vmatpush1.msra.mxu0 0.0
        %1200 = vmatprep.subr.mxu0 0.0
        %1201 = vmatpush1.msra.mxu0 0.0
        %1202 = vmatprep.subr.mxu0 0.0
        %1203 = vmatpush1.msra.mxu0 0.0
        %1204 = vmatprep.subr.mxu0 0.0
        %1205 = vmatpush1.msra.mxu0 0.0
        %1206 = vmatprep.subr.mxu0 0.0
        %1207 = vmatpush1.msra.mxu0 0.0
        %1208 = vmatprep.subr.mxu0 0.0
        %1209 = vmatpush1.msra.mxu0 0.0
        %1210 = vmatprep.subr.mxu0 0.0
        %1211 = vmatpush1.msra.mxu0 0.0
        %1212 = vmatprep.subr.mxu0 0.0
        %1213 = vmatpush1.msra.mxu0 0.0
        %1214 = vmatprep.subr.mxu0 0.0
        %1215 = vmatpush1.msra.mxu0 0.0
        %1216 = vmatprep.subr.mxu0 0.0
        %1217 = vmatpush1.msra.mxu0 0.0
        %1218 = vmatprep.subr.mxu0 0.0
        %1219 = vmatpush1.msra.mxu0 0.0
        %1220 = vmatprep.subr.mxu0 0.0
        %1221 = vmatpush1.msra.mxu0 0.0
        %1222 = vmatprep.subr.mxu0 0.0
        %1223 = vmatpush1.msra.mxu0 0.0
        %1224 = vmatprep.subr.mxu0 0.0
        %1225 = vmatpush1.msra.mxu0 0.0
        %1226 = vmatprep.subr.mxu0 0.0
        %1227 = vmatpush1.msra.mxu0 %v1106
        %1228 = vmatprep.subr.mxu0 0.0
        %1229 = vmatpush2.msra.mxu0 0.0
        %1230 = vmatprep.subr.mxu0 0.0
        %1231 = vmatpush2.msra.mxu0 0.0
        %1232 = vmatprep.subr.mxu0 0.0
        %1233 = vmatpush2.msra.mxu0 0.0
        %1234 = vmatprep.subr.mxu0 0.0
        %1235 = vmatpush2.msra.mxu0 0.0
        %1236 = vmatprep.subr.mxu0 0.0
        %1237 = vmatpush2.msra.mxu0 0.0
        %1238 = vmatprep.subr.mxu0 0.0
        %1239 = vmatpush2.msra.mxu0 0.0
        %1240 = vmatprep.subr.mxu0 0.0
        %1241 = vmatpush2.msra.mxu0 0.0
        %1242 = vmatprep.subr.mxu0 0.0
        %1243 = vmatpush2.msra.mxu0 0.0
        %1244 = vmatprep.subr.mxu0 0.0
        %1245 = vmatpush2.msra.mxu0 0.0
        %1246 = vmatprep.subr.mxu0 0.0
        %1247 = vmatpush2.msra.mxu0 0.0
        %1248 = vmatprep.subr.mxu0 0.0
        %1249 = vmatpush2.msra.mxu0 0.0
        %1250 = vmatprep.subr.mxu0 0.0
        %1251 = vmatpush2.msra.mxu0 0.0
        %1252 = vmatprep.subr.mxu0 0.0
        %1253 = vmatpush2.msra.mxu0 0.0
        %1254 = vmatprep.subr.mxu0 0.0
        %1255 = vmatpush2.msra.mxu0 0.0
        %1256 = vmatprep.subr.mxu0 0.0
        %1257 = vmatpush2.msra.mxu0 0.0
        %1258 = vmatprep.subr.mxu0 0.0
        %1259 = vmatpush2.msra.mxu0 0.0
        %1260 = vmatprep.mubr.f32.mxu0 0.0
        %1261 = vmatmul.mubr.f32.gmra.mxu0 %v1191
        %v1262 = vpop.f32.mrf.mxu0
        %v1263 = vadd.f32 0.0, %v1262
        %v1264 = vpop.f32.mrf.mxu0
        %1265 = vmatprep.mubr.f32.mxu0 0.0
        %1266 = vmatmul.mubr.f32.gmra.mxu0 %v1194
        %v1267 = vpop.f32.mrf.mxu0
        %v1268 = vadd.f32 0.0, %v1267
        %v1269 = vpop.f32.mrf.mxu0
        %1270 = vdwg.mxu0
        %v1272 = vsel %vm1032, %v1074, 0
        %v1275 = vsel %vm1032, %v1076, 0
        %1277 = vmatprep.subr.mxu0 0.0
        %1278 = vmatpush1.msra.mxu0 0.0
        %1279 = vmatprep.subr.mxu0 0.0
        %1280 = vmatpush1.msra.mxu0 0.0
        %1281 = vmatprep.subr.mxu0 0.0
        %1282 = vmatpush1.msra.mxu0 0.0
        %1283 = vmatprep.subr.mxu0 0.0
        %1284 = vmatpush1.msra.mxu0 0.0
        %1285 = vmatprep.subr.mxu0 0.0
        %1286 = vmatpush1.msra.mxu0 0.0
        %1287 = vmatprep.subr.mxu0 0.0
        %1288 = vmatpush1.msra.mxu0 0.0
        %1289 = vmatprep.subr.mxu0 0.0
        %1290 = vmatpush1.msra.mxu0 0.0
        %1291 = vmatprep.subr.mxu0 0.0
        %1292 = vmatpush1.msra.mxu0 0.0
        %1293 = vmatprep.subr.mxu0 0.0
        %1294 = vmatpush1.msra.mxu0 0.0
        %1295 = vmatprep.subr.mxu0 0.0
        %1296 = vmatpush1.msra.mxu0 0.0
        %1297 = vmatprep.subr.mxu0 0.0
        %1298 = vmatpush1.msra.mxu0 0.0
        %1299 = vmatprep.subr.mxu0 0.0
        %1300 = vmatpush1.msra.mxu0 0.0
        %1301 = vmatprep.subr.mxu0 0.0
        %1302 = vmatpush1.msra.mxu0 0.0
        %1303 = vmatprep.subr.mxu0 0.0
        %1304 = vmatpush1.msra.mxu0 0.0
        %1305 = vmatprep.subr.mxu0 0.0
        %1306 = vmatpush1.msra.mxu0 0.0
        %1307 = vmatprep.subr.mxu0 0.0
        %1308 = vmatpush1.msra.mxu0 %v1107
        %1309 = vmatprep.subr.mxu0 0.0
        %1310 = vmatpush2.msra.mxu0 0.0
        %1311 = vmatprep.subr.mxu0 0.0
        %1312 = vmatpush2.msra.mxu0 0.0
        %1313 = vmatprep.subr.mxu0 0.0
        %1314 = vmatpush2.msra.mxu0 0.0
        %1315 = vmatprep.subr.mxu0 0.0
        %1316 = vmatpush2.msra.mxu0 0.0
        %1317 = vmatprep.subr.mxu0 0.0
        %1318 = vmatpush2.msra.mxu0 0.0
        %1319 = vmatprep.subr.mxu0 0.0
        %1320 = vmatpush2.msra.mxu0 0.0
        %1321 = vmatprep.subr.mxu0 0.0
        %1322 = vmatpush2.msra.mxu0 0.0
        %1323 = vmatprep.subr.mxu0 0.0
        %1324 = vmatpush2.msra.mxu0 0.0
        %1325 = vmatprep.subr.mxu0 0.0
        %1326 = vmatpush2.msra.mxu0 0.0
        %1327 = vmatprep.subr.mxu0 0.0
        %1328 = vmatpush2.msra.mxu0 0.0
        %1329 = vmatprep.subr.mxu0 0.0
        %1330 = vmatpush2.msra.mxu0 0.0
        %1331 = vmatprep.subr.mxu0 0.0
        %1332 = vmatpush2.msra.mxu0 0.0
        %1333 = vmatprep.subr.mxu0 0.0
        %1334 = vmatpush2.msra.mxu0 0.0
        %1335 = vmatprep.subr.mxu0 0.0
        %1336 = vmatpush2.msra.mxu0 0.0
        %1337 = vmatprep.subr.mxu0 0.0
        %1338 = vmatpush2.msra.mxu0 0.0
        %1339 = vmatprep.subr.mxu0 0.0
        %1340 = vmatpush2.msra.mxu0 0.0
        %1341 = vmatprep.mubr.f32.mxu0 0.0
        %1342 = vmatmul.mubr.f32.gmra.mxu0 %v1272
        %v1343 = vpop.f32.mrf.mxu0
        %v1344 = vadd.f32 0.0, %v1343
        %v1345 = vpop.f32.mrf.mxu0
        %1346 = vmatprep.mubr.f32.mxu0 0.0
        %1347 = vmatmul.mubr.f32.gmra.mxu0 %v1275
        %v1348 = vpop.f32.mrf.mxu0
        %v1349 = vadd.f32 0.0, %v1348
        %v1350 = vpop.f32.mrf.mxu0
        %1351 = vdwg.mxu0
        %v1353 = vsel %vm1032, %v1078, 0
        %v1356 = vsel %vm1032, %v1080, 0
        %1358 = vmatprep.subr.mxu0 0.0
        %1359 = vmatpush1.msra.mxu0 0.0
        %1360 = vmatprep.subr.mxu0 0.0
        %1361 = vmatpush1.msra.mxu0 0.0
        %1362 = vmatprep.subr.mxu0 0.0
        %1363 = vmatpush1.msra.mxu0 0.0
        %1364 = vmatprep.subr.mxu0 0.0
        %1365 = vmatpush1.msra.mxu0 0.0
        %1366 = vmatprep.subr.mxu0 0.0
        %1367 = vmatpush1.msra.mxu0 0.0
        %1368 = vmatprep.subr.mxu0 0.0
        %1369 = vmatpush1.msra.mxu0 0.0
        %1370 = vmatprep.subr.mxu0 0.0
        %1371 = vmatpush1.msra.mxu0 0.0
        %1372 = vmatprep.subr.mxu0 0.0
        %1373 = vmatpush1.msra.mxu0 0.0
        %1374 = vmatprep.subr.mxu0 0.0
        %1375 = vmatpush1.msra.mxu0 0.0
        %1376 = vmatprep.subr.mxu0 0.0
        %1377 = vmatpush1.msra.mxu0 0.0
        %1378 = vmatprep.subr.mxu0 0.0
        %1379 = vmatpush1.msra.mxu0 0.0
        %1380 = vmatprep.subr.mxu0 0.0
        %1381 = vmatpush1.msra.mxu0 0.0
        %1382 = vmatprep.subr.mxu0 0.0
        %1383 = vmatpush1.msra.mxu0 0.0
        %1384 = vmatprep.subr.mxu0 0.0
        %1385 = vmatpush1.msra.mxu0 0.0
        %1386 = vmatprep.subr.mxu0 0.0
        %1387 = vmatpush1.msra.mxu0 0.0
        %1388 = vmatprep.subr.mxu0 0.0
        %1389 = vmatpush1.msra.mxu0 %v1108
        %1390 = vmatprep.subr.mxu0 0.0
        %1391 = vmatpush2.msra.mxu0 0.0
        %1392 = vmatprep.subr.mxu0 0.0
        %1393 = vmatpush2.msra.mxu0 0.0
        %1394 = vmatprep.subr.mxu0 0.0
        %1395 = vmatpush2.msra.mxu0 0.0
        %1396 = vmatprep.subr.mxu0 0.0
        %1397 = vmatpush2.msra.mxu0 0.0
        %1398 = vmatprep.subr.mxu0 0.0
        %1399 = vmatpush2.msra.mxu0 0.0
        %1400 = vmatprep.subr.mxu0 0.0
        %1401 = vmatpush2.msra.mxu0 0.0
        %1402 = vmatprep.subr.mxu0 0.0
        %1403 = vmatpush2.msra.mxu0 0.0
        %1404 = vmatprep.subr.mxu0 0.0
        %1405 = vmatpush2.msra.mxu0 0.0
        %1406 = vmatprep.subr.mxu0 0.0
        %1407 = vmatpush2.msra.mxu0 0.0
        %1408 = vmatprep.subr.mxu0 0.0
        %1409 = vmatpush2.msra.mxu0 0.0
        %1410 = vmatprep.subr.mxu0 0.0
        %1411 = vmatpush2.msra.mxu0 0.0
        %1412 = vmatprep.subr.mxu0 0.0
        %1413 = vmatpush2.msra.mxu0 0.0
        %1414 = vmatprep.subr.mxu0 0.0
        %1415 = vmatpush2.msra.mxu0 0.0
        %1416 = vmatprep.subr.mxu0 0.0
        %1417 = vmatpush2.msra.mxu0 0.0
        %1418 = vmatprep.subr.mxu0 0.0
        %1419 = vmatpush2.msra.mxu0 0.0
        %1420 = vmatprep.subr.mxu0 0.0
        %1421 = vmatpush2.msra.mxu0 0.0
        %1422 = vmatprep.mubr.f32.mxu0 0.0
        %1423 = vmatmul.mubr.f32.gmra.mxu0 %v1353
        %v1424 = vpop.f32.mrf.mxu0
        %v1425 = vadd.f32 0.0, %v1424
        %v1426 = vpop.f32.mrf.mxu0
        %1427 = vmatprep.mubr.f32.mxu0 0.0
        %1428 = vmatmul.mubr.f32.gmra.mxu0 %v1356
        %v1429 = vpop.f32.mrf.mxu0
        %v1430 = vadd.f32 0.0, %v1429
        %v1431 = vpop.f32.mrf.mxu0
        %1432 = vdwg.mxu0
        %v1433 = vrcp.pop %v1083
        %v1434 = vrcp.pop %v1086
        %v1435 = vrcp.pop %v1089
        %v1436 = vrcp.pop %v1092
        %v1437 = vrcp.pop %v1095
        %v1438 = vrcp.pop %v1098
        %v1439 = vrcp.pop %v1101
        %v1440 = vrcp.pop %v1104
        %v1441 = vmul.f32 %v1182, %v1433
        %v1442 = vmul.f32 %v1187, %v1434
        %v1443 = vmul.f32 %v1263, %v1435
        %v1444 = vmul.f32 %v1268, %v1436
        %v1445 = vmul.f32 %v1344, %v1437
        %v1446 = vmul.f32 %v1349, %v1438
        %v1447 = vmul.f32 %v1425, %v1439
        %v1448 = vmul.f32 %v1430, %v1440
        %1451 = vrot.lane.b32.xlu0 %v1443, 16
        %v1452 = vpop.permute.xlu0 %1451
        %1453 = vrot.lane.b32.xlu0 %v1444, 16
        %v1454 = vpop.permute.xlu0 %1453
        %1459 = vrot.lane.b32.xlu0 %v1445, 32
        %v1460 = vpop.permute.xlu0 %1459
        %1461 = vrot.lane.b32.xlu0 %v1446, 32
        %v1462 = vpop.permute.xlu0 %1461
        %1467 = vrot.lane.b32.xlu0 %v1447, 48
        %v1468 = vpop.permute.xlu0 %1467
        %1469 = vrot.lane.b32.xlu0 %v1448, 48
        %v1470 = vpop.permute.xlu0 %1469
        %v1473 = vsel %vm563, %v1441, %v1452
        %v1474 = vsel %vm563, %v1442, %v1454
        %v1475 = vsel %vm604, %v1473, %v1460
        %v1476 = vsel %vm604, %v1474, %v1462
        %vm1477 = vcmask 392192
        %v1478 = vsel %vm1477, %v1475, %v1468
        %v1479 = vsel %vm1477, %v1476, %v1470
        %v1480 = vld [vmem:[#allocation13] sm:$0xff]
        %v1481 = vld [vmem:[#allocation13 + $0x8] sm:$0xff]
        %v1482 = vld [vmem:[#allocation13 + $0x10] sm:$0xff]
        %v1483 = vld [vmem:[#allocation13 + $0x18] sm:$0xff]
        %v1484 = vld [vmem:[#allocation13 + $0x20] sm:$0xff]
        %v1485 = vld [vmem:[#allocation13 + $0x28] sm:$0xff]
        %v1486 = vld [vmem:[#allocation13 + $0x30] sm:$0xff]
        %v1487 = vld [vmem:[#allocation13 + $0x38] sm:$0xff]
        %v1488 = vld [vmem:[%s6] sm:$0x1]
        %v1490 = vlaneseq
        %v1491 = vshrl.u32 %v1490, 7
        %v1492 = vsub.s32 0, %v1491
        %v1493 = vrot.slane %v1488, %v1492
        %vm1495 = vcmask 523264
        %v1497 = vsel %vm1495, %v1478, 0
        %v1500 = vsel %vm1495, %v1479, 0
        %1502 = vmatprep.subr.mxu0 0.0
        %1503 = vmatpush1.msra.mxu0 0.0
        %1504 = vmatprep.subr.mxu0 0.0
        %1505 = vmatpush1.msra.mxu0 0.0
        %1506 = vmatprep.subr.mxu0 0.0
        %1507 = vmatpush1.msra.mxu0 0.0
        %1508 = vmatprep.subr.mxu0 0.0
        %1509 = vmatpush1.msra.mxu0 0.0
        %1510 = vmatprep.subr.mxu0 0.0
        %1511 = vmatpush1.msra.mxu0 0.0
        %1512 = vmatprep.subr.mxu0 0.0
        %1513 = vmatpush1.msra.mxu0 0.0
        %1514 = vmatprep.subr.mxu0 0.0
        %1515 = vmatpush1.msra.mxu0 0.0
        %1516 = vmatprep.subr.mxu0 0.0
        %1517 = vmatpush1.msra.mxu0 0.0
        %1518 = vmatprep.subr.mxu0 0.0
        %1519 = vmatpush1.msra.mxu0 %v1487
        %1520 = vmatprep.subr.mxu0 0.0
        %1521 = vmatpush1.msra.mxu0 %v1486
        %1522 = vmatprep.subr.mxu0 0.0
        %1523 = vmatpush1.msra.mxu0 %v1485
        %1524 = vmatprep.subr.mxu0 0.0
        %1525 = vmatpush1.msra.mxu0 %v1484
        %1526 = vmatprep.subr.mxu0 0.0
        %1527 = vmatpush1.msra.mxu0 %v1483
        %1528 = vmatprep.subr.mxu0 0.0
        %1529 = vmatpush1.msra.mxu0 %v1482
        %1530 = vmatprep.subr.mxu0 0.0
        %1531 = vmatpush1.msra.mxu0 %v1481
        %1532 = vmatprep.subr.mxu0 0.0
        %1533 = vmatpush1.msra.mxu0 %v1480
        %1534 = vmatprep.subr.mxu0 0.0
        %1535 = vmatpush2.msra.mxu0 0.0
        %1536 = vmatprep.subr.mxu0 0.0
        %1537 = vmatpush2.msra.mxu0 0.0
        %1538 = vmatprep.subr.mxu0 0.0
        %1539 = vmatpush2.msra.mxu0 0.0
        %1540 = vmatprep.subr.mxu0 0.0
        %1541 = vmatpush2.msra.mxu0 0.0
        %1542 = vmatprep.subr.mxu0 0.0
        %1543 = vmatpush2.msra.mxu0 0.0
        %1544 = vmatprep.subr.mxu0 0.0
        %1545 = vmatpush2.msra.mxu0 0.0
        %1546 = vmatprep.subr.mxu0 0.0
        %1547 = vmatpush2.msra.mxu0 0.0
        %1548 = vmatprep.subr.mxu0 0.0
        %1549 = vmatpush2.msra.mxu0 0.0
        %1550 = vmatprep.subr.mxu0 0.0
        %1551 = vmatpush2.msra.mxu0 0.0
        %1552 = vmatprep.subr.mxu0 0.0
        %1553 = vmatpush2.msra.mxu0 0.0
        %1554 = vmatprep.subr.mxu0 0.0
        %1555 = vmatpush2.msra.mxu0 0.0
        %1556 = vmatprep.subr.mxu0 0.0
        %1557 = vmatpush2.msra.mxu0 0.0
        %1558 = vmatprep.subr.mxu0 0.0
        %1559 = vmatpush2.msra.mxu0 0.0
        %1560 = vmatprep.subr.mxu0 0.0
        %1561 = vmatpush2.msra.mxu0 0.0
        %1562 = vmatprep.subr.mxu0 0.0
        %1563 = vmatpush2.msra.mxu0 0.0
        %1564 = vmatprep.subr.mxu0 0.0
        %1565 = vmatpush2.msra.mxu0 0.0
        %1566 = vmatprep.mubr.f32.mxu0 0.0
        %1567 = vmatmul.mubr.f32.gmra.mxu0 %v1497
        %v1568 = vpop.f32.mrf.mxu0
        %v1569 = vadd.f32 %v1493, %v1568
        %v1570 = vpop.f32.mrf.mxu0
        %1571 = vmatprep.mubr.f32.mxu0 0.0
        %1572 = vmatmul.mubr.f32.gmra.mxu0 %v1500
        %v1573 = vpop.f32.mrf.mxu0
        %v1574 = vadd.f32 %v1493, %v1573
        %v1575 = vpop.f32.mrf.mxu0
        %1576 = vdwg.mxu0
        %1577 = vst [vmem:[%s409] sm:$0xff] %v1569
        %1578 = vst [vmem:[%s409 + $0x8] sm:$0xff] %v1574
        %s1579 = sand.u32 %s210, 1
        %s1580 = scalar_lea.sflag [#allocation6], %s1579
        %s1581 = sand.u32 %s210, 1
        %s1582 = smul.addr %s1581, 16
        %s1583 = scalar_lea.vmem [#allocation15], %s1582
        // Predicated region
        $region73: #{tpu_custom_call.1} parent=47 // pred_check
          %p1584 = pneg %p220
        $region74: #{tpu_custom_call.1} parent=47 // pred_check_branch
          %1586 = sbr.rel (%p1584) target = $region76
        $region75: #{tpu_custom_call.1} parent=47 // pred_region
          %s1587 = smul.u32 2, %s34
          %s1589 = ssub.s32 256, 256
          %1590 = vsyncadd %s1580, %s1589
          %s1591 = smul.addr %s33, 2
          %s1592 = sadd.s32 %s1587, %s1591
          %s1593 = smul.addr %s1592, 128
          %s1594 = scalar_lea.hbm %s7, %s1593
          %s1595 = sshll.u32 %s1583, 4
          %s1596 = int_to_ptr.vmem [resolvable:$true] %s1595
          %1601 = dma.vmem_to_hbm [thread:$0]  %s1596, 256, %s1594, %s1580, 128, 128, 8
        $region76: #{tpu_custom_call.1} parent=47 // pred_fallthru
          _
      $region48: #{tpu_custom_call.1} parent=5 // pred_fallthru
        _
      %p1602 = scmp.le.s32.totalorder 2, %s24
      // Predicated region
      $region77: #{tpu_custom_call.1} parent=5 // pred_check
        %p1603 = pneg %p1602
      $region78: #{tpu_custom_call.1} parent=5 // pred_check_branch
        %1605 = sbr.rel (%p1603) target = $region80
      $region79: #{tpu_custom_call.1} parent=5 // pred_region
        %s1606 = ssub.s32 %s24, 2
        // Predicated region
        $region81: #{tpu_custom_call.1} parent=79 // pred_check
          %p1607 = pneg %p226
        $region82: #{tpu_custom_call.1} parent=79 // pred_check_branch
          %1609 = sbr.rel (%p1607) target = $region84
        $region83: #{tpu_custom_call.1} parent=79 // pred_region
          %s1610 = sand.u32 %s211, 1
          %s1611 = scalar_lea.sflag [#allocation6], %s1610
          %s1612 = sand.u32 %s211, 1
          %s1613 = smul.addr %s1612, 16
          %s1614 = scalar_lea.vmem [#allocation15], %s1613
          %1615 = dma.done %s1611, 256
        $region84: #{tpu_custom_call.1} parent=79 // pred_fallthru
          _
      $region80: #{tpu_custom_call.1} parent=5 // pred_fallthru
        _
    $region6: #{tpu_custom_call.1} parent=1 // loop_footer
      %s28 = sadd.s32 1, %s24
    $region7: #{tpu_custom_call.1} parent=1 // loop_footer_branch
      %23 = sbr.rel target = $region3
    $region8: #{tpu_custom_call.1} parent=1 // loop_exit
      _
    %1616 = vsyncpa [#allocation5], 1
    %s1617 = scalar_lea.sflag [#allocation5], 1
    %1618 = vsyncpa %s1617, 1
    %1619 = vsyncpa [#allocation8], 1
    %s1620 = scalar_lea.sflag [#allocation8], 1
    %1621 = vsyncpa %s1620, 1
    %1622 = vsyncpa [#allocation11], 1
    %1623 = vsyncpa [#allocation14], 1
    %1624 = vsyncpa [#allocation6], 1
    %s1625 = scalar_lea.sflag [#allocation6], 1
    %1626 = vsyncpa %s1625, 1

</llo_original>
